<compile_context>
chip_gen: v7x
topology: tpu7x:2x2x1
jax: 0.10.0
libtpu: 0.0.40
codegen_flags: <defaults>
</compile_context>

<pallas_src>
import jax
import jax.numpy as jnp
import numpy as np
from jax.experimental import pallas as pl
from jax.experimental.pallas import tpu as pltpu


# --------------------------------------------------------------------------- #
# Kernels
# --------------------------------------------------------------------------- #
def _resblock_kernel_shortcut(x_ref, w0_ref, b0_ref, w1_ref, b1_ref, ws_ref, o_ref):
    x = x_ref[...]                                                  # compute dtype (bf16/f32)
    h0 = jnp.maximum(x, 0)                                          # ReLU (exact in any dtype)
    net = jnp.dot(h0, w0_ref[...], preferred_element_type=jnp.float32) + b0_ref[...]
    h1 = jnp.maximum(net, 0.0).astype(w1_ref.dtype)                 # ReLU in f32, cast for MXU
    dx = jnp.dot(h1, w1_ref[...], preferred_element_type=jnp.float32) + b1_ref[...]
    x_s = jnp.dot(x, ws_ref[...], preferred_element_type=jnp.float32)
    o_ref[...] = (x_s + dx).astype(o_ref.dtype)                     # residual add in f32


def _resblock_kernel_identity(x_ref, w0_ref, b0_ref, w1_ref, b1_ref, o_ref):
    x = x_ref[...]
    h0 = jnp.maximum(x, 0)
    net = jnp.dot(h0, w0_ref[...], preferred_element_type=jnp.float32) + b0_ref[...]
    h1 = jnp.maximum(net, 0.0).astype(w1_ref.dtype)
    dx = jnp.dot(h1, w1_ref[...], preferred_element_type=jnp.float32) + b1_ref[...]
    o_ref[...] = (x.astype(jnp.float32) + dx).astype(o_ref.dtype)


# --------------------------------------------------------------------------- #
# Parameter init (mirrors the PyTorch __init__)
# --------------------------------------------------------------------------- #
def init_resnet_block_params(key, size_in, size_out=None, size_h=None, dtype=jnp.float32):
    """kaiming_normal(fan_in) for fc_0 / shortcut, zeros for fc_1.weight and biases.
    Weights are stored pre-transposed as [in_features, out_features]."""
    if size_out is None:
        size_out = size_in
    if size_h is None:
        size_h = min(size_in, size_out)
    k0, ks = jax.random.split(key)
    w0 = jax.random.normal(k0, (size_in, size_h), dtype) * jnp.sqrt(2.0 / size_in)
    b0 = jnp.zeros((size_h,), dtype)
    w1 = jnp.zeros((size_h, size_out), dtype)          # nn.init.zeros_(fc_1.weight)
    b1 = jnp.zeros((size_out,), dtype)
    params = dict(w0=w0, b0=b0, w1=w1, b1=b1)
    if size_in != size_out:
        params["ws"] = jax.random.normal(ks, (size_in, size_out), dtype) * jnp.sqrt(2.0 / size_in)
    return params


# --------------------------------------------------------------------------- #
# Wrapper
# --------------------------------------------------------------------------- #
_LANE = 128
_SUB = 8
_VMEM_BUDGET = 24 * 1024 * 1024   # conservative: fits v7x's 32 MiB scoped default


def _round_up(n, m):
    return (n + m - 1) // m * m


def _pad2d(a, rows, cols):
    return jnp.pad(a, ((0, rows - a.shape[0]), (0, cols - a.shape[1])))


def resnet_block_fc(x, params, *, tile_rows=512, compute_dtype=jnp.bfloat16):
    """x: [..., size_in] -> [..., size_out].  Leading dims are flattened into rows."""
    orig_dtype = x.dtype
    size_in = x.shape[-1]
    lead = x.shape[:-1]
    x2 = x.reshape(-1, size_in)
    n_rows = x2.shape[0]

    w0, b0, w1, b1 = params["w0"], params["b0"], params["w1"], params["b1"]
    size_h = w0.shape[1]
    size_out = w1.shape[1]
    has_shortcut = "ws" in params

    # ---- pad feature dims to lane width (128) -> lane-dense loads/stores -------------
    d_in = _round_up(size_in, _LANE)
    d_h = _round_up(size_h, _LANE)
    d_out = _round_up(size_out, _LANE)

    w0p = _pad2d(w0, d_in, d_h).astype(compute_dtype)
    w1p = _pad2d(w1, d_h, d_out).astype(compute_dtype)
    b0p = _pad2d(b0.reshape(1, -1), 1, d_h).astype(jnp.float32)
    b1p = _pad2d(b1.reshape(1, -1), 1, d_out).astype(jnp.float32)
    wsp = _pad2d(params["ws"], d_in, d_out).astype(compute_dtype) if has_shortcut else None

    # ---- pick the row tile: large, VMEM-bounded, multiple of 8 ----------------------
    cbytes = np.dtype(compute_dtype).itemsize
    obytes = np.dtype(orig_dtype).itemsize
    w_elems = d_in * d_h + d_h * d_out + (d_in * d_out if has_shortcut else 0)

    def vmem_bytes(tr):
        io = 2 * tr * d_in * cbytes + 2 * tr * d_out * obytes       # double-buffered x / out tiles
        weights = 2 * (w_elems * cbytes + (d_h + d_out) * 4)        # worst case: double-buffered
        inter = tr * (d_in + 2 * d_h + 3 * d_out) * 4               # f32 intermediates in flight
        return io + weights + inter

    tile_rows = max(_SUB, min(int(tile_rows), _round_up(n_rows, _SUB)))
    tile_rows = _round_up(tile_rows, _SUB)
    while tile_rows > _SUB and vmem_bytes(tile_rows) > _VMEM_BUDGET:
        tile_rows = _round_up(tile_rows // 2, _SUB)

    n_rows_p = _round_up(n_rows, tile_rows)
    # keep >= 2 grid steps when possible so both v7x TensorCores get work
    if n_rows_p // tile_rows == 1 and tile_rows > _SUB:
        tile_rows = _round_up(tile_rows // 2, _SUB)
        n_rows_p = _round_up(n_rows, tile_rows)

    # ---- pad rows + cast activations ------------------------------------------------
    x2p = jnp.pad(x2, ((0, n_rows_p - n_rows), (0, d_in - size_in))).astype(compute_dtype)
    grid = (n_rows_p // tile_rows,)

    def _run(weight_mode):
        def wspec(shape):
            if weight_mode is None:
                return pl.BlockSpec(shape, lambda i: (0, 0))
            return pl.BlockSpec(shape, lambda i: (0, 0), pipeline_mode=weight_mode)

        in_specs = [pl.BlockSpec((tile_rows, d_in), lambda i: (i, 0)),
                    wspec(w0p.shape), wspec(b0p.shape),
                    wspec(w1p.shape), wspec(b1p.shape)]
        args = [x2p, w0p, b0p, w1p, b1p]
        if has_shortcut:
            in_specs.append(wspec(wsp.shape))
            args.append(wsp)
        kern = _resblock_kernel_shortcut if has_shortcut else _resblock_kernel_identity

        return pl.pallas_call(
            kern,
            out_shape=jax.ShapeDtypeStruct((n_rows_p, d_out), orig_dtype),
            grid=grid,
            in_specs=in_specs,
            out_specs=pl.BlockSpec((tile_rows, d_out), lambda i: (i, 0)),
            compiler_params=pltpu.CompilerParams(dimension_semantics=("parallel",)),
        )(*args)

    try:
        # grid-invariant weights/biases only need a single VMEM buffer
        y = _run(pl.Buffered(1))
    except Exception:
        # fall back to default double-buffering if single-buffering is unsupported
        y = _run(None)

    return y[:n_rows, :size_out].reshape(*lead, size_out)


# --------------------------------------------------------------------------- #
# Pure-JAX reference (matches the PyTorch forward, with matching dtype handling)
# --------------------------------------------------------------------------- #
def resnet_block_fc_ref(x, params, compute_dtype=jnp.float32):
    cd = compute_dtype
    xc = x.astype(cd)
    h0 = jnp.maximum(xc, 0)
    net = jnp.dot(h0, params["w0"].astype(cd),
                  preferred_element_type=jnp.float32) + params["b0"].astype(jnp.float32)
    h1 = jnp.maximum(net, 0.0).astype(cd)
    dx = jnp.dot(h1, params["w1"].astype(cd),
                 preferred_element_type=jnp.float32) + params["b1"].astype(jnp.float32)
    if "ws" in params:
        x_s = jnp.dot(xc, params["ws"].astype(cd), preferred_element_type=jnp.float32)
    else:
        x_s = xc.astype(jnp.float32)
    return (x_s + dx).astype(x.dtype)


# --------------------------------------------------------------------------- #
if __name__ == "__main__":
    key = jax.random.PRNGKey(0)
    k_param, k_x, k_w1 = jax.random.split(key, 3)

    B, S = 2, 7                     # 14 rows -> exercises ragged-row padding
    size_in, size_out = 32, 64      # size_h = 32; shortcut Linear is used

    params = init_resnet_block_params(k_param, size_in, size_out)
    # PyTorch inits fc_1.weight to zeros (dx would be 0); perturb deterministically
    # so the full dx path is actually exercised by the numeric check.
    params["w1"] = jax.random.normal(k_w1, params["w1"].shape, jnp.float32) * 0.1

    x = jax.random.normal(k_x, (B, S, size_in), jnp.float32)

    # bf16 compute (MXU-native) + f32 accumulation
    out = jax.block_until_ready(resnet_block_fc(x, params))
    ref = resnet_block_fc_ref(x, params, compute_dtype=jnp.bfloat16)
    assert out.shape == (B, S, size_out)
    assert jnp.allclose(out, ref, atol=1e-2, rtol=1e-2), "mismatch vs bf16 reference"

    # identity-shortcut variant (size_in == size_out), faithful PyTorch init, f32 compute
    params_id = init_resnet_block_params(k_param, size_in)
    out_id = jax.block_until_ready(
        resnet_block_fc(x, params_id, compute_dtype=jnp.float32))
    ref_id = resnet_block_fc_ref(x, params_id, compute_dtype=jnp.float32)
    assert out_id.shape == (B, S, size_in)
    assert jnp.allclose(out_id, ref_id, atol=1e-4, rtol=1e-4), "mismatch vs f32 reference"

    print("KERNEL_OK")
</pallas_src>

<mosaic_0001>
module attributes {stable_mosaic.version = 11 : i64} {
  func.func @_resblock_kernel_shortcut(%arg0: i32, %arg1: memref<8x128xbf16, #tpu.memory_space<vmem>>, %arg2: memref<128x128xbf16, #tpu.memory_space<vmem>>, %arg3: memref<1x128xf32, #tpu.memory_space<vmem>>, %arg4: memref<128x128xbf16, #tpu.memory_space<vmem>>, %arg5: memref<1x128xf32, #tpu.memory_space<vmem>>, %arg6: memref<128x128xbf16, #tpu.memory_space<vmem>>, %arg7: memref<8x128xf32, #tpu.memory_space<vmem>>) attributes {dimension_semantics = [#tpu.dimension_semantics<parallel>], iteration_bounds = array<i64: 2>, scalar_prefetch = 0 : i64, scratch_operands = 0 : i64, tpu.core_type = #tpu.core_type<tc>, window_params = [{transform_indices = @transform_0, window_bounds = array<i64: 8, 128>}, {pipeline_mode = #tpu.pipeline_mode<synchronous>, transform_indices = @transform_1, window_bounds = array<i64: 128, 128>}, {pipeline_mode = #tpu.pipeline_mode<synchronous>, transform_indices = @transform_2, window_bounds = array<i64: 1, 128>}, {pipeline_mode = #tpu.pipeline_mode<synchronous>, transform_indices = @transform_3, window_bounds = array<i64: 128, 128>}, {pipeline_mode = #tpu.pipeline_mode<synchronous>, transform_indices = @transform_4, window_bounds = array<i64: 1, 128>}, {pipeline_mode = #tpu.pipeline_mode<synchronous>, transform_indices = @transform_5, window_bounds = array<i64: 128, 128>}, {transform_indices = @transform_6, window_bounds = array<i64: 8, 128>}]} {
    %c0 = arith.constant 0 : index
    %c0_0 = arith.constant 0 : index
    %0 = vector.load %arg1[%c0, %c0_0] : memref<8x128xbf16, #tpu.memory_space<vmem>>, vector<8x128xbf16>
    %cst = arith.constant 0.000000e+00 : bf16
    %1 = vector.broadcast %cst : bf16 to vector<8x128xbf16>
    %2 = arith.maximumf %0, %1 : vector<8x128xbf16>
    %c0_1 = arith.constant 0 : index
    %c0_2 = arith.constant 0 : index
    %3 = vector.load %arg2[%c0_1, %c0_2] : memref<128x128xbf16, #tpu.memory_space<vmem>>, vector<128x128xbf16>
    %cst_3 = arith.constant dense<0.000000e+00> : vector<8x128xf32>
    %4 = tpu.matmul %2, %3, %cst_3 {dimension_numbers = #tpu.dot_dimension_numbers<[1], [0], [0], [1], [0, 0, 1, 1], [], []>} : vector<8x128xbf16>, vector<128x128xbf16>, vector<8x128xf32> -> vector<8x128xf32>
    %c0_4 = arith.constant 0 : index
    %c0_5 = arith.constant 0 : index
    %5 = vector.load %arg3[%c0_4, %c0_5] : memref<1x128xf32, #tpu.memory_space<vmem>>, vector<1x128xf32>
    %6 = vector.broadcast %5 : vector<1x128xf32> to vector<8x128xf32>
    %7 = arith.addf %4, %6 : vector<8x128xf32>
    %cst_6 = arith.constant 0.000000e+00 : f32
    %8 = vector.broadcast %cst_6 : f32 to vector<8x128xf32>
    %9 = arith.maximumf %7, %8 : vector<8x128xf32>
    %10 = arith.truncf %9 : vector<8x128xf32> to vector<8x128xbf16>
    %c0_7 = arith.constant 0 : index
    %c0_8 = arith.constant 0 : index
    %11 = vector.load %arg4[%c0_7, %c0_8] : memref<128x128xbf16, #tpu.memory_space<vmem>>, vector<128x128xbf16>
    %cst_9 = arith.constant dense<0.000000e+00> : vector<8x128xf32>
    %12 = tpu.matmul %10, %11, %cst_9 {dimension_numbers = #tpu.dot_dimension_numbers<[1], [0], [0], [1], [0, 0, 1, 1], [], []>} : vector<8x128xbf16>, vector<128x128xbf16>, vector<8x128xf32> -> vector<8x128xf32>
    %c0_10 = arith.constant 0 : index
    %c0_11 = arith.constant 0 : index
    %13 = vector.load %arg5[%c0_10, %c0_11] : memref<1x128xf32, #tpu.memory_space<vmem>>, vector<1x128xf32>
    %14 = vector.broadcast %13 : vector<1x128xf32> to vector<8x128xf32>
    %15 = arith.addf %12, %14 : vector<8x128xf32>
    %c0_12 = arith.constant 0 : index
    %c0_13 = arith.constant 0 : index
    %16 = vector.load %arg6[%c0_12, %c0_13] : memref<128x128xbf16, #tpu.memory_space<vmem>>, vector<128x128xbf16>
    %cst_14 = arith.constant dense<0.000000e+00> : vector<8x128xf32>
    %17 = tpu.matmul %0, %16, %cst_14 {dimension_numbers = #tpu.dot_dimension_numbers<[1], [0], [0], [1], [0, 0, 1, 1], [], []>} : vector<8x128xbf16>, vector<128x128xbf16>, vector<8x128xf32> -> vector<8x128xf32>
    %18 = arith.addf %17, %15 : vector<8x128xf32>
    %c0_15 = arith.constant 0 : index
    %c0_16 = arith.constant 0 : index
    %19 = vector.load %arg7[%c0_15, %c0_16] : memref<8x128xf32, #tpu.memory_space<vmem>>, vector<8x128xf32>
    tpu.vector_store %arg7[%c0_15, %c0_16], %18 {strides = array<i32>} : memref<8x128xf32, #tpu.memory_space<vmem>>, vector<8x128xf32>,
    return
  }
  func.func @transform_0(%arg0: i32) -> (i32, i32) {
    %c0_i32 = arith.constant 0 : i32
    %c0_i32_0 = arith.constant 0 : i32
    return %arg0, %c0_i32 : i32, i32
  }
  func.func @transform_1(%arg0: i32) -> (i32, i32) {
    %c0_i32 = arith.constant 0 : i32
    %c0_i32_0 = arith.constant 0 : i32
    %c0_i32_1 = arith.constant 0 : i32
    return %c0_i32, %c0_i32_0 : i32, i32
  }
  func.func @transform_2(%arg0: i32) -> (i32, i32) {
    %c0_i32 = arith.constant 0 : i32
    %c0_i32_0 = arith.constant 0 : i32
    %c0_i32_1 = arith.constant 0 : i32
    return %c0_i32, %c0_i32_0 : i32, i32
  }
  func.func @transform_3(%arg0: i32) -> (i32, i32) {
    %c0_i32 = arith.constant 0 : i32
    %c0_i32_0 = arith.constant 0 : i32
    %c0_i32_1 = arith.constant 0 : i32
    return %c0_i32, %c0_i32_0 : i32, i32
  }
  func.func @transform_4(%arg0: i32) -> (i32, i32) {
    %c0_i32 = arith.constant 0 : i32
    %c0_i32_0 = arith.constant 0 : i32
    %c0_i32_1 = arith.constant 0 : i32
    return %c0_i32, %c0_i32_0 : i32, i32
  }
  func.func @transform_5(%arg0: i32) -> (i32, i32) {
    %c0_i32 = arith.constant 0 : i32
    %c0_i32_0 = arith.constant 0 : i32
    %c0_i32_1 = arith.constant 0 : i32
    return %c0_i32, %c0_i32_0 : i32, i32
  }
  func.func @transform_6(%arg0: i32) -> (i32, i32) {
    %c0_i32 = arith.constant 0 : i32
    %c0_i32_0 = arith.constant 0 : i32
    return %arg0, %c0_i32 : i32, i32
  }
}

module attributes {stable_mosaic.version = 11 : i64} {
  func.func @_resblock_kernel_shortcut(%arg0: i32, %arg1: memref<8x128xbf16, #tpu.memory_space<vmem>>, %arg2: memref<128x128xbf16, #tpu.memory_space<vmem>>, %arg3: memref<1x128xf32, #tpu.memory_space<vmem>>, %arg4: memref<128x128xbf16, #tpu.memory_space<vmem>>, %arg5: memref<1x128xf32, #tpu.memory_space<vmem>>, %arg6: memref<128x128xbf16, #tpu.memory_space<vmem>>, %arg7: memref<8x128xf32, #tpu.memory_space<vmem>>) attributes {dimension_semantics = [#tpu.dimension_semantics<parallel>], iteration_bounds = array<i64: 2>, scalar_prefetch = 0 : i64, scratch_operands = 0 : i64, tpu.core_type = #tpu.core_type<tc>, window_params = [{transform_indices = @transform_0, window_bounds = array<i64: 8, 128>}, {pipeline_mode = #tpu.pipeline_mode<synchronous>, transform_indices = @transform_1, window_bounds = array<i64: 128, 128>}, {pipeline_mode = #tpu.pipeline_mode<synchronous>, transform_indices = @transform_2, window_bounds = array<i64: 1, 128>}, {pipeline_mode = #tpu.pipeline_mode<synchronous>, transform_indices = @transform_3, window_bounds = array<i64: 128, 128>}, {pipeline_mode = #tpu.pipeline_mode<synchronous>, transform_indices = @transform_4, window_bounds = array<i64: 1, 128>}, {pipeline_mode = #tpu.pipeline_mode<synchronous>, transform_indices = @transform_5, window_bounds = array<i64: 128, 128>}, {transform_indices = @transform_6, window_bounds = array<i64: 8, 128>}]} {
    %c0 = arith.constant 0 : index
    %c0_0 = arith.constant 0 : index
    %0 = vector.load %arg1[%c0, %c0_0] : memref<8x128xbf16, #tpu.memory_space<vmem>>, vector<8x128xbf16>
    %cst = arith.constant 0.000000e+00 : bf16
    %1 = vector.broadcast %cst : bf16 to vector<8x128xbf16>
    %2 = arith.maximumf %0, %1 : vector<8x128xbf16>
    %c0_1 = arith.constant 0 : index
    %c0_2 = arith.constant 0 : index
    %3 = vector.load %arg2[%c0_1, %c0_2] : memref<128x128xbf16, #tpu.memory_space<vmem>>, vector<128x128xbf16>
    %cst_3 = arith.constant dense<0.000000e+00> : vector<8x128xf32>
    %4 = tpu.matmul %2, %3, %cst_3 {dimension_numbers = #tpu.dot_dimension_numbers<[1], [0], [0], [1], [0, 0, 1, 1], [], []>} : vector<8x128xbf16>, vector<128x128xbf16>, vector<8x128xf32> -> vector<8x128xf32>
    %c0_4 = arith.constant 0 : index
    %c0_5 = arith.constant 0 : index
    %5 = vector.load %arg3[%c0_4, %c0_5] : memref<1x128xf32, #tpu.memory_space<vmem>>, vector<1x128xf32>
    %6 = vector.broadcast %5 : vector<1x128xf32> to vector<8x128xf32>
    %7 = arith.addf %4, %6 : vector<8x128xf32>
    %cst_6 = arith.constant 0.000000e+00 : f32
    %8 = vector.broadcast %cst_6 : f32 to vector<8x128xf32>
    %9 = arith.maximumf %7, %8 : vector<8x128xf32>
    %10 = arith.truncf %9 : vector<8x128xf32> to vector<8x128xbf16>
    %c0_7 = arith.constant 0 : index
    %c0_8 = arith.constant 0 : index
    %11 = vector.load %arg4[%c0_7, %c0_8] : memref<128x128xbf16, #tpu.memory_space<vmem>>, vector<128x128xbf16>
    %cst_9 = arith.constant dense<0.000000e+00> : vector<8x128xf32>
    %12 = tpu.matmul %10, %11, %cst_9 {dimension_numbers = #tpu.dot_dimension_numbers<[1], [0], [0], [1], [0, 0, 1, 1], [], []>} : vector<8x128xbf16>, vector<128x128xbf16>, vector<8x128xf32> -> vector<8x128xf32>
    %c0_10 = arith.constant 0 : index
    %c0_11 = arith.constant 0 : index
    %13 = vector.load %arg5[%c0_10, %c0_11] : memref<1x128xf32, #tpu.memory_space<vmem>>, vector<1x128xf32>
    %14 = vector.broadcast %13 : vector<1x128xf32> to vector<8x128xf32>
    %15 = arith.addf %12, %14 : vector<8x128xf32>
    %c0_12 = arith.constant 0 : index
    %c0_13 = arith.constant 0 : index
    %16 = vector.load %arg6[%c0_12, %c0_13] : memref<128x128xbf16, #tpu.memory_space<vmem>>, vector<128x128xbf16>
    %cst_14 = arith.constant dense<0.000000e+00> : vector<8x128xf32>
    %17 = tpu.matmul %0, %16, %cst_14 {dimension_numbers = #tpu.dot_dimension_numbers<[1], [0], [0], [1], [0, 0, 1, 1], [], []>} : vector<8x128xbf16>, vector<128x128xbf16>, vector<8x128xf32> -> vector<8x128xf32>
    %18 = arith.addf %17, %15 : vector<8x128xf32>
    %c0_15 = arith.constant 0 : index
    %c0_16 = arith.constant 0 : index
    %19 = vector.load %arg7[%c0_15, %c0_16] : memref<8x128xf32, #tpu.memory_space<vmem>>, vector<8x128xf32>
    tpu.vector_store %arg7[%c0_15, %c0_16], %18 {strides = array<i32>} : memref<8x128xf32, #tpu.memory_space<vmem>>, vector<8x128xf32>,
    return
  }
  func.func @transform_0(%arg0: i32) -> (i32, i32) {
    %c0_i32 = arith.constant 0 : i32
    %c0_i32_0 = arith.constant 0 : i32
    return %arg0, %c0_i32 : i32, i32
  }
  func.func @transform_1(%arg0: i32) -> (i32, i32) {
    %c0_i32 = arith.constant 0 : i32
    %c0_i32_0 = arith.constant 0 : i32
    %c0_i32_1 = arith.constant 0 : i32
    return %c0_i32, %c0_i32_0 : i32, i32
  }
  func.func @transform_2(%arg0: i32) -> (i32, i32) {
    %c0_i32 = arith.constant 0 : i32
    %c0_i32_0 = arith.constant 0 : i32
    %c0_i32_1 = arith.constant 0 : i32
    return %c0_i32, %c0_i32_0 : i32, i32
  }
  func.func @transform_3(%arg0: i32) -> (i32, i32) {
    %c0_i32 = arith.constant 0 : i32
    %c0_i32_0 = arith.constant 0 : i32
    %c0_i32_1 = arith.constant 0 : i32
    return %c0_i32, %c0_i32_0 : i32, i32
  }
  func.func @transform_4(%arg0: i32) -> (i32, i32) {
    %c0_i32 = arith.constant 0 : i32
    %c0_i32_0 = arith.constant 0 : i32
    %c0_i32_1 = arith.constant 0 : i32
    return %c0_i32, %c0_i32_0 : i32, i32
  }
  func.func @transform_5(%arg0: i32) -> (i32, i32) {
    %c0_i32 = arith.constant 0 : i32
    %c0_i32_0 = arith.constant 0 : i32
    %c0_i32_1 = arith.constant 0 : i32
    return %c0_i32, %c0_i32_0 : i32, i32
  }
  func.func @transform_6(%arg0: i32) -> (i32, i32) {
    %c0_i32 = arith.constant 0 : i32
    %c0_i32_0 = arith.constant 0 : i32
    return %arg0, %c0_i32 : i32, i32
  }
}

</mosaic_0001>

<llo_original>
// kernel: tpu_custom_call.1
$region0: #{tpu_custom_call.1}
  #allocation0 [shape = 'u32[]', space=smem, size = 0x4, offset = 0x4, fixed_abs, tag = 'smem constant byte address 0x4 - core index']
  #allocation1 [shape = 'u32[144,128]{1,0:T(1,128)}', space=vmem, size = 0x12000, scoped, tag = 'internal scratch']
  %s0 = inlined_call_operand.hbm [shape: bf16[16,128], index: 0, kind: input, shape index: {}]
  %s1 = inlined_call_operand.hbm [shape: bf16[128,128], index: 1, kind: input, shape index: {}]
  %s2 = inlined_call_operand.vmem [shape: f32[1,128], index: 2, kind: input, shape index: {}]
  %s3 = inlined_call_operand.hbm [shape: bf16[128,128], index: 3, kind: input, shape index: {}]
  %s4 = inlined_call_operand.vmem [shape: f32[1,128], index: 4, kind: input, shape index: {}]
  %s5 = inlined_call_operand.hbm [shape: bf16[128,128], index: 5, kind: input, shape index: {}]
  %s6 = inlined_call_operand.hbm [shape: f32[16,128], index: 6, kind: output, shape index: {}]
  %s7 = sld [smem:[#allocation0]]
  $region73: #{tpu_custom_call.1} parent=0
    _
  %s9 = ssub.s32 1, %s7
  %s10 = scalar_select 0, %s9, %s7
  $region1: #{tpu_custom_call.1} parent=0
    #allocation2 [shape = 'u8[4096]{0}', space=vmem, size = 0x1000, scoped, tag = 'input window, operand 0']
    #allocation3 [shape = 's32[2]{0}', space=sflag, size = 0x8, scoped, tag = 'scoped memory for tpu_custom_call.1']
    #allocation4 [shape = 's32[2]{0}', space=sflag, size = 0x8, scoped, tag = 'scoped memory for tpu_custom_call.1']
    #allocation5 [shape = 'u8[32768]{0}', space=vmem, size = 0x8000, scoped, tag = 'input window, operand 1, single buffered']
    #allocation6 [shape = 's32[1]{0}', space=sflag, size = 0x4, scoped, tag = 'scoped memory for tpu_custom_call.1']
    #allocation7 [shape = 'u8[32768]{0}', space=vmem, size = 0x8000, scoped, tag = 'input window, operand 3, single buffered']
    #allocation8 [shape = 'u8[32768]{0}', space=vmem, size = 0x8000, scoped, tag = 'input window, operand 5, single buffered']
    #allocation9 [shape = 's32[1]{0}', space=sflag, size = 0x4, scoped, tag = 'scoped memory for tpu_custom_call.1']
    #allocation10 [shape = 'u8[8192]{0}', space=vmem, size = 0x2000, scoped, tag = 'output window, operand 0']
    %11 = vsyncpa [#allocation3], 0
    %s12 = scalar_lea.sflag [#allocation3], 1
    %13 = vsyncpa %s12, 0
    %14 = vsyncpa [#allocation6], 0
    %15 = vsyncpa [#allocation9], 0
    %16 = vsyncpa [#allocation4], 0
    %s17 = scalar_lea.sflag [#allocation4], 1
    %18 = vsyncpa %s17, 0
    loop: start=0, step=1, limit=4
    $region2: #{tpu_custom_call.1} parent=1 // loop_pre_header
      _
    $region3: #{tpu_custom_call.1} parent=1 // loop_header
      %s20 = sphi 0, %s24
      %p21 = scmp.ge.s32.totalorder %s20, 4
      %s30 = sphi 0, %s32
      %s33 = sphi 0, %s30
      %s34 = sphi 0, %s33
      %s50 = sphi 0, %s34
      %s54 = sphi 0, %s54
      %s56 = sphi 0, %s54
      %s57 = sphi 0, %s56
      %s71 = sphi 0, %s57
      %s75 = sphi 0, %s75
      %s77 = sphi 0, %s75
      %s78 = sphi 0, %s77
      %s92 = sphi 0, %s78
      %s96 = sphi 0, %s96
      %s98 = sphi 0, %s96
      %s99 = sphi 0, %s98
      %s113 = sphi 0, %s99
      %s117 = sphi 0, %s117
      %s119 = sphi 0, %s117
      %s120 = sphi 0, %s119
      %s134 = sphi 0, %s120
      %s138 = sphi 0, %s138
      %s140 = sphi 0, %s138
      %s141 = sphi 0, %s140
      %s155 = sphi 0, %s141
      %s161 = sphi 0, %s163
      %s164 = sphi 0, %s161
      %s165 = sphi 0, %s164
      %s181 = sphi 0, %s165
    $region4: #{tpu_custom_call.1} parent=1 // loop_header_branch
      %23 = sbr.rel (%p21) target = $region8
    $region5: #{tpu_custom_call.1} parent=1 // loop_body
      %s25 = ssub.s32 %s20, 1
      %s26 = ssub.s32 %s20, 2
      %s27 = sadd.s32 %s20, 1
      %s28 = ssub.s32 %s20, %s27
      %p29 = scmp.eq.s32.totalorder %s28, 0
      %s31 = sadd.s32 %s30, 1
      %s32 = scalar_select %p29, %s30, %s31
      %p35 = pneg %p29
      %p36 = scmp.eq.s32.totalorder %s20, 1
      %p37 = por %p35, %p36
      %p38 = scmp.ne.s32.totalorder %s30, %s33
      %p39 = scmp.eq.s32.totalorder %s20, 0
      %p40 = por %p38, %p39
      %p41 = scmp.ne.s32.totalorder %s30, %s33
      %p42 = scmp.eq.s32.totalorder %s25, 1
      %p43 = por %p41, %p42
      %p44 = scmp.ne.s32.totalorder %s33, %s34
      %p45 = scmp.eq.s32.totalorder %s25, 0
      %p46 = por %p44, %p45
      %p47 = scmp.ne.s32.totalorder %s33, %s34
      %p48 = scmp.eq.s32.totalorder %s26, 1
      %p49 = por %p47, %p48
      %p51 = scmp.ne.s32.totalorder %s34, %s50
      %p52 = scmp.eq.s32.totalorder %s26, 0
      %p53 = por %p51, %p52
      %s55 = sadd.s32 %s54, 1
      %p58 = scmp.eq.s32.totalorder %s20, 1
      %p59 = scmp.ne.s32.totalorder %s54, %s56
      %p60 = scmp.eq.s32.totalorder %s20, 0
      %p61 = por %p59, %p60
      %p62 = scmp.ne.s32.totalorder %s54, %s56
      %p63 = scmp.eq.s32.totalorder %s25, 1
      %p64 = por %p62, %p63
      %p65 = scmp.ne.s32.totalorder %s56, %s57
      %p66 = scmp.eq.s32.totalorder %s25, 0
      %p67 = por %p65, %p66
      %p68 = scmp.ne.s32.totalorder %s56, %s57
      %p69 = scmp.eq.s32.totalorder %s26, 1
      %p70 = por %p68, %p69
      %p72 = scmp.ne.s32.totalorder %s57, %s71
      %p73 = scmp.eq.s32.totalorder %s26, 0
      %p74 = por %p72, %p73
      %s76 = sadd.s32 %s75, 1
      %p79 = scmp.eq.s32.totalorder %s20, 1
      %p80 = scmp.ne.s32.totalorder %s75, %s77
      %p81 = scmp.eq.s32.totalorder %s20, 0
      %p82 = por %p80, %p81
      %p83 = scmp.ne.s32.totalorder %s75, %s77
      %p84 = scmp.eq.s32.totalorder %s25, 1
      %p85 = por %p83, %p84
      %p86 = scmp.ne.s32.totalorder %s77, %s78
      %p87 = scmp.eq.s32.totalorder %s25, 0
      %p88 = por %p86, %p87
      %p89 = scmp.ne.s32.totalorder %s77, %s78
      %p90 = scmp.eq.s32.totalorder %s26, 1
      %p91 = por %p89, %p90
      %p93 = scmp.ne.s32.totalorder %s78, %s92
      %p94 = scmp.eq.s32.totalorder %s26, 0
      %p95 = por %p93, %p94
      %s97 = sadd.s32 %s96, 1
      %p100 = scmp.eq.s32.totalorder %s20, 1
      %p101 = scmp.ne.s32.totalorder %s96, %s98
      %p102 = scmp.eq.s32.totalorder %s20, 0
      %p103 = por %p101, %p102
      %p104 = scmp.ne.s32.totalorder %s96, %s98
      %p105 = scmp.eq.s32.totalorder %s25, 1
      %p106 = por %p104, %p105
      %p107 = scmp.ne.s32.totalorder %s98, %s99
      %p108 = scmp.eq.s32.totalorder %s25, 0
      %p109 = por %p107, %p108
      %p110 = scmp.ne.s32.totalorder %s98, %s99
      %p111 = scmp.eq.s32.totalorder %s26, 1
      %p112 = por %p110, %p111
      %p114 = scmp.ne.s32.totalorder %s99, %s113
      %p115 = scmp.eq.s32.totalorder %s26, 0
      %p116 = por %p114, %p115
      %s118 = sadd.s32 %s117, 1
      %p121 = scmp.eq.s32.totalorder %s20, 1
      %p122 = scmp.ne.s32.totalorder %s117, %s119
      %p123 = scmp.eq.s32.totalorder %s20, 0
      %p124 = por %p122, %p123
      %p125 = scmp.ne.s32.totalorder %s117, %s119
      %p126 = scmp.eq.s32.totalorder %s25, 1
      %p127 = por %p125, %p126
      %p128 = scmp.ne.s32.totalorder %s119, %s120
      %p129 = scmp.eq.s32.totalorder %s25, 0
      %p130 = por %p128, %p129
      %p131 = scmp.ne.s32.totalorder %s119, %s120
      %p132 = scmp.eq.s32.totalorder %s26, 1
      %p133 = por %p131, %p132
      %p135 = scmp.ne.s32.totalorder %s120, %s134
      %p136 = scmp.eq.s32.totalorder %s26, 0
      %p137 = por %p135, %p136
      %s139 = sadd.s32 %s138, 1
      %p142 = scmp.eq.s32.totalorder %s20, 1
      %p143 = scmp.ne.s32.totalorder %s138, %s140
      %p144 = scmp.eq.s32.totalorder %s20, 0
      %p145 = por %p143, %p144
      %p146 = scmp.ne.s32.totalorder %s138, %s140
      %p147 = scmp.eq.s32.totalorder %s25, 1
      %p148 = por %p146, %p147
      %p149 = scmp.ne.s32.totalorder %s140, %s141
      %p150 = scmp.eq.s32.totalorder %s25, 0
      %p151 = por %p149, %p150
      %p152 = scmp.ne.s32.totalorder %s140, %s141
      %p153 = scmp.eq.s32.totalorder %s26, 1
      %p154 = por %p152, %p153
      %p156 = scmp.ne.s32.totalorder %s141, %s155
      %p157 = scmp.eq.s32.totalorder %s26, 0
      %p158 = por %p156, %p157
      %s159 = ssub.s32 %s20, %s27
      %p160 = scmp.eq.s32.totalorder %s159, 0
      %s162 = sadd.s32 %s161, 1
      %s163 = scalar_select %p160, %s161, %s162
      %p166 = pneg %p160
      %p167 = scmp.eq.s32.totalorder %s20, 1
      %p168 = por %p166, %p167
      %p169 = scmp.ne.s32.totalorder %s161, %s164
      %p170 = scmp.eq.s32.totalorder %s20, 0
      %p171 = por %p169, %p170
      %p172 = scmp.ne.s32.totalorder %s161, %s164
      %p173 = scmp.eq.s32.totalorder %s25, 1
      %p174 = por %p172, %p173
      %p175 = scmp.ne.s32.totalorder %s164, %s165
      %p176 = scmp.eq.s32.totalorder %s25, 0
      %p177 = por %p175, %p176
      %p178 = scmp.ne.s32.totalorder %s164, %s165
      %p179 = scmp.eq.s32.totalorder %s26, 1
      %p180 = por %p178, %p179
      %p182 = scmp.ne.s32.totalorder %s165, %s181
      %p183 = scmp.eq.s32.totalorder %s26, 0
      %p184 = por %p182, %p183
      %p185 = scmp.le.s32.totalorder 1, %s20
      %p186 = scmp.lt.s32.totalorder %s20, 3
      %p187 = pnand %p185, %p186
      %p188 = pneg %p187
      // Predicated region
      $region9: #{tpu_custom_call.1} parent=5 // pred_check
        _
      $region10: #{tpu_custom_call.1} parent=5 // pred_check_branch
        %190 = sbr.rel (%p187) target = $region12
      $region11: #{tpu_custom_call.1} parent=5 // pred_region
        %s191 = ssub.s32 %s20, 1
        // Predicated region
        $region13: #{tpu_custom_call.1} parent=11 // pred_check
          %p192 = pneg %p67
        $region14: #{tpu_custom_call.1} parent=11 // pred_check_branch
          %194 = sbr.rel (%p192) target = $region16
        $region15: #{tpu_custom_call.1} parent=11 // pred_region
          %s196 = ssub.s32 1024, 1024
          %197 = vsyncadd [#allocation6], %s196
          %s198 = sshll.u32 [#allocation5], 4
          %s199 = int_to_ptr.vmem [resolvable:$true] %s198
          %204 = dma.hbm_to_vmem [thread:$0]  %s1, 1024, %s199, [#allocation6], 64, 64, 4
        $region16: #{tpu_custom_call.1} parent=11 // pred_fallthru
          _
        // Predicated region
        $region17: #{tpu_custom_call.1} parent=11 // pred_check
          %p205 = pneg %p88
        $region18: #{tpu_custom_call.1} parent=11 // pred_check_branch
          %207 = sbr.rel (%p205) target = $region20
        $region19: #{tpu_custom_call.1} parent=11 // pred_region
          _
        $region20: #{tpu_custom_call.1} parent=11 // pred_fallthru
          _
        // Predicated region
        $region21: #{tpu_custom_call.1} parent=11 // pred_check
          %p208 = pneg %p109
        $region22: #{tpu_custom_call.1} parent=11 // pred_check_branch
          %210 = sbr.rel (%p208) target = $region24
        $region23: #{tpu_custom_call.1} parent=11 // pred_region
          %s212 = ssub.s32 1024, 1024
          %213 = vsyncadd [#allocation6], %s212
          %s214 = sshll.u32 [#allocation7], 4
          %s215 = int_to_ptr.vmem [resolvable:$true] %s214
          %220 = dma.hbm_to_vmem [thread:$0]  %s3, 1024, %s215, [#allocation6], 64, 64, 4
        $region24: #{tpu_custom_call.1} parent=11 // pred_fallthru
          _
        // Predicated region
        $region25: #{tpu_custom_call.1} parent=11 // pred_check
          %p221 = pneg %p130
        $region26: #{tpu_custom_call.1} parent=11 // pred_check_branch
          %223 = sbr.rel (%p221) target = $region28
        $region27: #{tpu_custom_call.1} parent=11 // pred_region
          _
        $region28: #{tpu_custom_call.1} parent=11 // pred_fallthru
          _
        // Predicated region
        $region29: #{tpu_custom_call.1} parent=11 // pred_check
          %p224 = pneg %p151
        $region30: #{tpu_custom_call.1} parent=11 // pred_check_branch
          %226 = sbr.rel (%p224) target = $region32
        $region31: #{tpu_custom_call.1} parent=11 // pred_region
          %s228 = ssub.s32 1024, 1024
          %229 = vsyncadd [#allocation9], %s228
          %s230 = sshll.u32 [#allocation8], 4
          %s231 = int_to_ptr.vmem [resolvable:$true] %s230
          %236 = dma.hbm_to_vmem [thread:$0]  %s5, 1024, %s231, [#allocation9], 64, 64, 4
        $region32: #{tpu_custom_call.1} parent=11 // pred_fallthru
          _
      $region12: #{tpu_custom_call.1} parent=5 // pred_fallthru
        _
      %p237 = scmp.lt.s32.totalorder %s20, 2
      // Predicated region
      $region33: #{tpu_custom_call.1} parent=5 // pred_check
        %p238 = pneg %p237
      $region34: #{tpu_custom_call.1} parent=5 // pred_check_branch
        %240 = sbr.rel (%p238) target = $region36
      $region35: #{tpu_custom_call.1} parent=5 // pred_region
        // Predicated region
        $region37: #{tpu_custom_call.1} parent=35 // pred_check
          %p241 = pneg %p40
        $region38: #{tpu_custom_call.1} parent=35 // pred_check_branch
          %243 = sbr.rel (%p241) target = $region40
        $region39: #{tpu_custom_call.1} parent=35 // pred_region
          %s244 = sand.u32 %s30, 1
          %s245 = scalar_lea.sflag [#allocation3], %s244
          %s246 = sand.u32 %s30, 1
          %s247 = smul.addr %s246, 4
          %s248 = scalar_lea.vmem [#allocation2], %s247
          %s250 = ssub.s32 64, 64
          %251 = vsyncadd %s245, %s250
          %s252 = smul.addr %s20, 64
          %s253 = scalar_lea.hbm %s0, %s252
          %s255 = sshll.u32 %s248, 4
          %s256 = int_to_ptr.vmem [resolvable:$true] %s255
          %258 = dma.hbm_to_vmem [thread:$0]  %s253, 64, %s256, %s245
        $region40: #{tpu_custom_call.1} parent=35 // pred_fallthru
          _
      $region36: #{tpu_custom_call.1} parent=5 // pred_fallthru
        _
      %p259 = scmp.le.s32.totalorder 1, %s20
      %p260 = scmp.lt.s32.totalorder %s20, 3
      %p261 = pnand %p259, %p260
      %p262 = pneg %p261
      // Predicated region
      $region41: #{tpu_custom_call.1} parent=5 // pred_check
        _
      $region42: #{tpu_custom_call.1} parent=5 // pred_check_branch
        %264 = sbr.rel (%p261) target = $region44
      $region43: #{tpu_custom_call.1} parent=5 // pred_region
        %s265 = ssub.s32 %s20, 1
        %s266 = sand.u32 %s33, 1
        %s267 = scalar_lea.sflag [#allocation3], %s266
        %s268 = sand.u32 %s33, 1
        %s269 = smul.addr %s268, 4
        %s270 = scalar_lea.vmem [#allocation2], %s269
        // Predicated region
        $region45: #{tpu_custom_call.1} parent=43 // pred_check
          %p271 = pneg %p46
        $region46: #{tpu_custom_call.1} parent=43 // pred_check_branch
          %273 = sbr.rel (%p271) target = $region48
        $region47: #{tpu_custom_call.1} parent=43 // pred_region
          %274 = dma.done %s267, 64
        $region48: #{tpu_custom_call.1} parent=43 // pred_fallthru
          _
        // Predicated region
        $region49: #{tpu_custom_call.1} parent=43 // pred_check
          %p275 = pneg %p67
        $region50: #{tpu_custom_call.1} parent=43 // pred_check_branch
          %277 = sbr.rel (%p275) target = $region52
        $region51: #{tpu_custom_call.1} parent=43 // pred_region
          %278 = dma.done [#allocation6], 1024
        $region52: #{tpu_custom_call.1} parent=43 // pred_fallthru
          _
        // Predicated region
        $region53: #{tpu_custom_call.1} parent=43 // pred_check
          %p279 = pneg %p109
        $region54: #{tpu_custom_call.1} parent=43 // pred_check_branch
          %281 = sbr.rel (%p279) target = $region56
        $region55: #{tpu_custom_call.1} parent=43 // pred_region
          %282 = dma.done [#allocation6], 1024
        $region56: #{tpu_custom_call.1} parent=43 // pred_fallthru
          _
        // Predicated region
        $region57: #{tpu_custom_call.1} parent=43 // pred_check
          %p283 = pneg %p151
        $region58: #{tpu_custom_call.1} parent=43 // pred_check_branch
          %285 = sbr.rel (%p283) target = $region60
        $region59: #{tpu_custom_call.1} parent=43 // pred_region
          %286 = dma.done [#allocation9], 1024
        $region60: #{tpu_custom_call.1} parent=43 // pred_fallthru
          _
        %s287 = sand.u32 %s33, 1
        %s288 = scalar_lea.sflag [#allocation3], %s287
        %s289 = sand.u32 %s33, 1
        %s290 = smul.addr %s289, 4
        %s291 = scalar_lea.vmem [#allocation2], %s290
        %p292 = pneg %p46
        %p293 = pneg %p43
        %p294 = pneg %p67
        %p295 = pneg %p64
        %p296 = pneg %p88
        %p297 = pneg %p85
        %p298 = pneg %p109
        %p299 = pneg %p106
        %p300 = pneg %p130
        %p301 = pneg %p127
        %p302 = pneg %p151
        %p303 = pneg %p148
        %p304 = pneg %p177
        %p305 = pneg %p174
        %s306 = sand.u32 %s164, 1
        %s307 = scalar_lea.sflag [#allocation4], %s306
        %s308 = sand.u32 %s164, 1
        %s309 = smul.addr %s308, 8
        %s310 = scalar_lea.vmem [#allocation10], %s309
        %v312 = vld [vmem:[%s270] sm:$0xf]
        %v313 = vmax.bf16 %v312, 0
        %v314 = vld [vmem:[#allocation5] sm:$0xf]
        %v315 = vld [vmem:[#allocation5 + $0x4] sm:$0xf]
        %v316 = vld [vmem:[#allocation5 + $0x8] sm:$0xf]
        %v317 = vld [vmem:[#allocation5 + $0xc] sm:$0xf]
        %v318 = vld [vmem:[#allocation5 + $0x10] sm:$0xf]
        %v319 = vld [vmem:[#allocation5 + $0x14] sm:$0xf]
        %v320 = vld [vmem:[#allocation5 + $0x18] sm:$0xf]
        %v321 = vld [vmem:[#allocation5 + $0x1c] sm:$0xf]
        %v322 = vld [vmem:[#allocation5 + $0x20] sm:$0xf]
        %v323 = vld [vmem:[#allocation5 + $0x24] sm:$0xf]
        %v324 = vld [vmem:[#allocation5 + $0x28] sm:$0xf]
        %v325 = vld [vmem:[#allocation5 + $0x2c] sm:$0xf]
        %v326 = vld [vmem:[#allocation5 + $0x30] sm:$0xf]
        %v327 = vld [vmem:[#allocation5 + $0x34] sm:$0xf]
        %v328 = vld [vmem:[#allocation5 + $0x38] sm:$0xf]
        %v329 = vld [vmem:[#allocation5 + $0x3c] sm:$0xf]
        %v330 = vld [vmem:[%s2] sm:$0x1]
        %v332 = vlaneseq
        %v333 = vshrl.u32 %v332, 7
        %v334 = vsub.s32 0, %v333
        %v335 = vrot.slane %v330, %v334
        %v353 = vunpack.c.l.b16 %v314
        %v354 = vunpack.c.l.b16 %v315
        %v355 = vunpack.c.l.b16 %v316
        %v356 = vunpack.c.l.b16 %v317
        %v357 = vunpack.c.l.b16 %v318
        %v358 = vunpack.c.l.b16 %v319
        %v359 = vunpack.c.l.b16 %v320
        %v360 = vunpack.c.l.b16 %v321
        %v361 = vunpack.c.l.b16 %v322
        %v362 = vunpack.c.l.b16 %v323
        %v363 = vunpack.c.l.b16 %v324
        %v364 = vunpack.c.l.b16 %v325
        %v365 = vunpack.c.l.b16 %v326
        %v366 = vunpack.c.l.b16 %v327
        %v367 = vunpack.c.l.b16 %v328
        %v368 = vunpack.c.l.b16 %v329
        %v369 = vpack.c.b16 %v354, %v353
        %v370 = vpack.c.b16 %v356, %v355
        %v371 = vpack.c.b16 %v358, %v357
        %v372 = vpack.c.b16 %v360, %v359
        %v373 = vpack.c.b16 %v362, %v361
        %v374 = vpack.c.b16 %v364, %v363
        %v375 = vpack.c.b16 %v366, %v365
        %v376 = vpack.c.b16 %v368, %v367
        %385 = vmatprep.subr.bf16.mxu0 0
        %386 = vmatpush1.bf16.msra.mxu0 %v369
        %387 = vmatprep.subr.bf16.mxu0 0
        %388 = vmatpush1.bf16.msra.mxu0 %v370
        %389 = vmatprep.subr.bf16.mxu0 0
        %390 = vmatpush1.bf16.msra.mxu0 %v371
        %391 = vmatprep.subr.bf16.mxu0 0
        %392 = vmatpush1.bf16.msra.mxu0 %v372
        %393 = vmatprep.subr.bf16.mxu0 0
        %394 = vmatpush1.bf16.msra.mxu0 %v373
        %395 = vmatprep.subr.bf16.mxu0 0
        %396 = vmatpush1.bf16.msra.mxu0 %v374
        %397 = vmatprep.subr.bf16.mxu0 0
        %398 = vmatpush1.bf16.msra.mxu0 %v375
        %399 = vmatprep.subr.bf16.mxu0 0
        %400 = vmatpush1.bf16.msra.mxu0 %v376
        %401 = vmatprep.subr.bf16.mxu0 0
        %402 = vmatpush1.bf16.msra.mxu0 0
        %403 = vmatprep.subr.bf16.mxu0 0
        %404 = vmatpush1.bf16.msra.mxu0 0
        %405 = vmatprep.subr.bf16.mxu0 0
        %406 = vmatpush1.bf16.msra.mxu0 0
        %407 = vmatprep.subr.bf16.mxu0 0
        %408 = vmatpush1.bf16.msra.mxu0 0
        %409 = vmatprep.subr.bf16.mxu0 0
        %410 = vmatpush1.bf16.msra.mxu0 0
        %411 = vmatprep.subr.bf16.mxu0 0
        %412 = vmatpush1.bf16.msra.mxu0 0
        %413 = vmatprep.subr.bf16.mxu0 0
        %414 = vmatpush1.bf16.msra.mxu0 0
        %415 = vmatprep.subr.bf16.mxu0 0
        %416 = vmatpush1.bf16.msra.mxu0 0
        %417 = vmatprep.mubr.bf16.mxu0 0
        %418 = vmatmul.mubr.bf16.gmra.mrb[0].mxu0 %v313
        %v419 = vpop.f32.mrb[0].mxu0
        %v420 = vadd.f32 %v335, %v419
        %v421 = vpop.f32.mrb[0].mxu0
        %v422 = vpop.f32.mrb[0].mxu0
        %v423 = vpop.f32.mrb[0].mxu0
        %424 = vdwg.mxu0
        %v425 = vmax.f32 %v420, 0.0
        %v426 = vpack.c.bf16 %v425, %v425
        %v427 = vld [vmem:[#allocation7] sm:$0xf]
        %v428 = vld [vmem:[#allocation7 + $0x4] sm:$0xf]
        %v429 = vld [vmem:[#allocation7 + $0x8] sm:$0xf]
        %v430 = vld [vmem:[#allocation7 + $0xc] sm:$0xf]
        %v431 = vld [vmem:[#allocation7 + $0x10] sm:$0xf]
        %v432 = vld [vmem:[#allocation7 + $0x14] sm:$0xf]
        %v433 = vld [vmem:[#allocation7 + $0x18] sm:$0xf]
        %v434 = vld [vmem:[#allocation7 + $0x1c] sm:$0xf]
        %v435 = vld [vmem:[#allocation7 + $0x20] sm:$0xf]
        %v436 = vld [vmem:[#allocation7 + $0x24] sm:$0xf]
        %v437 = vld [vmem:[#allocation7 + $0x28] sm:$0xf]
        %v438 = vld [vmem:[#allocation7 + $0x2c] sm:$0xf]
        %v439 = vld [vmem:[#allocation7 + $0x30] sm:$0xf]
        %v440 = vld [vmem:[#allocation7 + $0x34] sm:$0xf]
        %v441 = vld [vmem:[#allocation7 + $0x38] sm:$0xf]
        %v442 = vld [vmem:[#allocation7 + $0x3c] sm:$0xf]
        %v443 = vld [vmem:[%s4] sm:$0x1]
        %v445 = vlaneseq
        %v446 = vshrl.u32 %v445, 7
        %v447 = vsub.s32 0, %v446
        %v448 = vrot.slane %v443, %v447
        %v466 = vunpack.c.l.b16 %v427
        %v467 = vunpack.c.l.b16 %v428
        %v468 = vunpack.c.l.b16 %v429
        %v469 = vunpack.c.l.b16 %v430
        %v470 = vunpack.c.l.b16 %v431
        %v471 = vunpack.c.l.b16 %v432
        %v472 = vunpack.c.l.b16 %v433
        %v473 = vunpack.c.l.b16 %v434
        %v474 = vunpack.c.l.b16 %v435
        %v475 = vunpack.c.l.b16 %v436
        %v476 = vunpack.c.l.b16 %v437
        %v477 = vunpack.c.l.b16 %v438
        %v478 = vunpack.c.l.b16 %v439
        %v479 = vunpack.c.l.b16 %v440
        %v480 = vunpack.c.l.b16 %v441
        %v481 = vunpack.c.l.b16 %v442
        %v482 = vpack.c.b16 %v467, %v466
        %v483 = vpack.c.b16 %v469, %v468
        %v484 = vpack.c.b16 %v471, %v470
        %v485 = vpack.c.b16 %v473, %v472
        %v486 = vpack.c.b16 %v475, %v474
        %v487 = vpack.c.b16 %v477, %v476
        %v488 = vpack.c.b16 %v479, %v478
        %v489 = vpack.c.b16 %v481, %v480
        %498 = vmatprep.subr.bf16.mxu0 0
        %499 = vmatpush1.bf16.msra.mxu0 %v482
        %500 = vmatprep.subr.bf16.mxu0 0
        %501 = vmatpush1.bf16.msra.mxu0 %v483
        %502 = vmatprep.subr.bf16.mxu0 0
        %503 = vmatpush1.bf16.msra.mxu0 %v484
        %504 = vmatprep.subr.bf16.mxu0 0
        %505 = vmatpush1.bf16.msra.mxu0 %v485
        %506 = vmatprep.subr.bf16.mxu0 0
        %507 = vmatpush1.bf16.msra.mxu0 %v486
        %508 = vmatprep.subr.bf16.mxu0 0
        %509 = vmatpush1.bf16.msra.mxu0 %v487
        %510 = vmatprep.subr.bf16.mxu0 0
        %511 = vmatpush1.bf16.msra.mxu0 %v488
        %512 = vmatprep.subr.bf16.mxu0 0
        %513 = vmatpush1.bf16.msra.mxu0 %v489
        %514 = vmatprep.subr.bf16.mxu0 0
        %515 = vmatpush1.bf16.msra.mxu0 0
        %516 = vmatprep.subr.bf16.mxu0 0
        %517 = vmatpush1.bf16.msra.mxu0 0
        %518 = vmatprep.subr.bf16.mxu0 0
        %519 = vmatpush1.bf16.msra.mxu0 0
        %520 = vmatprep.subr.bf16.mxu0 0
        %521 = vmatpush1.bf16.msra.mxu0 0
        %522 = vmatprep.subr.bf16.mxu0 0
        %523 = vmatpush1.bf16.msra.mxu0 0
        %524 = vmatprep.subr.bf16.mxu0 0
        %525 = vmatpush1.bf16.msra.mxu0 0
        %526 = vmatprep.subr.bf16.mxu0 0
        %527 = vmatpush1.bf16.msra.mxu0 0
        %528 = vmatprep.subr.bf16.mxu0 0
        %529 = vmatpush1.bf16.msra.mxu0 0
        %530 = vmatprep.mubr.bf16.mxu0 0
        %531 = vmatmul.mubr.bf16.gmra.mrb[0].mxu0 %v426
        %v532 = vpop.f32.mrb[0].mxu0
        %v533 = vadd.f32 %v448, %v532
        %v534 = vpop.f32.mrb[0].mxu0
        %v535 = vpop.f32.mrb[0].mxu0
        %v536 = vpop.f32.mrb[0].mxu0
        %537 = vdwg.mxu0
        %v538 = vld [vmem:[#allocation8] sm:$0xf]
        %v539 = vld [vmem:[#allocation8 + $0x4] sm:$0xf]
        %v540 = vld [vmem:[#allocation8 + $0x8] sm:$0xf]
        %v541 = vld [vmem:[#allocation8 + $0xc] sm:$0xf]
        %v542 = vld [vmem:[#allocation8 + $0x10] sm:$0xf]
        %v543 = vld [vmem:[#allocation8 + $0x14] sm:$0xf]
        %v544 = vld [vmem:[#allocation8 + $0x18] sm:$0xf]
        %v545 = vld [vmem:[#allocation8 + $0x1c] sm:$0xf]
        %v546 = vld [vmem:[#allocation8 + $0x20] sm:$0xf]
        %v547 = vld [vmem:[#allocation8 + $0x24] sm:$0xf]
        %v548 = vld [vmem:[#allocation8 + $0x28] sm:$0xf]
        %v549 = vld [vmem:[#allocation8 + $0x2c] sm:$0xf]
        %v550 = vld [vmem:[#allocation8 + $0x30] sm:$0xf]
        %v551 = vld [vmem:[#allocation8 + $0x34] sm:$0xf]
        %v552 = vld [vmem:[#allocation8 + $0x38] sm:$0xf]
        %v553 = vld [vmem:[#allocation8 + $0x3c] sm:$0xf]
        %v570 = vunpack.c.l.b16 %v538
        %v571 = vunpack.c.l.b16 %v539
        %v572 = vunpack.c.l.b16 %v540
        %v573 = vunpack.c.l.b16 %v541
        %v574 = vunpack.c.l.b16 %v542
        %v575 = vunpack.c.l.b16 %v543
        %v576 = vunpack.c.l.b16 %v544
        %v577 = vunpack.c.l.b16 %v545
        %v578 = vunpack.c.l.b16 %v546
        %v579 = vunpack.c.l.b16 %v547
        %v580 = vunpack.c.l.b16 %v548
        %v581 = vunpack.c.l.b16 %v549
        %v582 = vunpack.c.l.b16 %v550
        %v583 = vunpack.c.l.b16 %v551
        %v584 = vunpack.c.l.b16 %v552
        %v585 = vunpack.c.l.b16 %v553
        %v586 = vpack.c.b16 %v571, %v570
        %v587 = vpack.c.b16 %v573, %v572
        %v588 = vpack.c.b16 %v575, %v574
        %v589 = vpack.c.b16 %v577, %v576
        %v590 = vpack.c.b16 %v579, %v578
        %v591 = vpack.c.b16 %v581, %v580
        %v592 = vpack.c.b16 %v583, %v582
        %v593 = vpack.c.b16 %v585, %v584
        %602 = vmatprep.subr.bf16.mxu0 0
        %603 = vmatpush1.bf16.msra.mxu0 %v586
        %604 = vmatprep.subr.bf16.mxu0 0
        %605 = vmatpush1.bf16.msra.mxu0 %v587
        %606 = vmatprep.subr.bf16.mxu0 0
        %607 = vmatpush1.bf16.msra.mxu0 %v588
        %608 = vmatprep.subr.bf16.mxu0 0
        %609 = vmatpush1.bf16.msra.mxu0 %v589
        %610 = vmatprep.subr.bf16.mxu0 0
        %611 = vmatpush1.bf16.msra.mxu0 %v590
        %612 = vmatprep.subr.bf16.mxu0 0
        %613 = vmatpush1.bf16.msra.mxu0 %v591
        %614 = vmatprep.subr.bf16.mxu0 0
        %615 = vmatpush1.bf16.msra.mxu0 %v592
        %616 = vmatprep.subr.bf16.mxu0 0
        %617 = vmatpush1.bf16.msra.mxu0 %v593
        %618 = vmatprep.subr.bf16.mxu0 0
        %619 = vmatpush1.bf16.msra.mxu0 0
        %620 = vmatprep.subr.bf16.mxu0 0
        %621 = vmatpush1.bf16.msra.mxu0 0
        %622 = vmatprep.subr.bf16.mxu0 0
        %623 = vmatpush1.bf16.msra.mxu0 0
        %624 = vmatprep.subr.bf16.mxu0 0
        %625 = vmatpush1.bf16.msra.mxu0 0
        %626 = vmatprep.subr.bf16.mxu0 0
        %627 = vmatpush1.bf16.msra.mxu0 0
        %628 = vmatprep.subr.bf16.mxu0 0
        %629 = vmatpush1.bf16.msra.mxu0 0
        %630 = vmatprep.subr.bf16.mxu0 0
        %631 = vmatpush1.bf16.msra.mxu0 0
        %632 = vmatprep.subr.bf16.mxu0 0
        %633 = vmatpush1.bf16.msra.mxu0 0
        %634 = vmatprep.mubr.bf16.mxu0 0
        %635 = vmatmul.mubr.bf16.gmra.mrb[0].mxu0 %v312
        %v636 = vpop.f32.mrb[0].mxu0
        %v637 = vadd.f32 %v533, %v636
        %v638 = vpop.f32.mrb[0].mxu0
        %v639 = vpop.f32.mrb[0].mxu0
        %v640 = vpop.f32.mrb[0].mxu0
        %641 = vdwg.mxu0
        %642 = vst [vmem:[%s310] sm:$0xff] %v637
        %s643 = sand.u32 %s164, 1
        %s644 = scalar_lea.sflag [#allocation4], %s643
        %s645 = sand.u32 %s164, 1
        %s646 = smul.addr %s645, 8
        %s647 = scalar_lea.vmem [#allocation10], %s646
        // Predicated region
        $region61: #{tpu_custom_call.1} parent=43 // pred_check
          %p648 = pneg %p174
        $region62: #{tpu_custom_call.1} parent=43 // pred_check_branch
          %650 = sbr.rel (%p648) target = $region64
        $region63: #{tpu_custom_call.1} parent=43 // pred_region
          %s652 = ssub.s32 128, 128
          %653 = vsyncadd %s644, %s652
          %s654 = smul.addr %s25, 128
          %s655 = scalar_lea.hbm %s6, %s654
          %s657 = sshll.u32 %s647, 4
          %s658 = int_to_ptr.vmem [resolvable:$true] %s657
          %660 = dma.vmem_to_hbm [thread:$0]  %s658, 128, %s655, %s644
        $region64: #{tpu_custom_call.1} parent=43 // pred_fallthru
          _
      $region44: #{tpu_custom_call.1} parent=5 // pred_fallthru
        _
      %p661 = scmp.le.s32.totalorder 2, %s20
      // Predicated region
      $region65: #{tpu_custom_call.1} parent=5 // pred_check
        %p662 = pneg %p661
      $region66: #{tpu_custom_call.1} parent=5 // pred_check_branch
        %664 = sbr.rel (%p662) target = $region68
      $region67: #{tpu_custom_call.1} parent=5 // pred_region
        %s665 = ssub.s32 %s20, 2
        // Predicated region
        $region69: #{tpu_custom_call.1} parent=67 // pred_check
          %p666 = pneg %p180
        $region70: #{tpu_custom_call.1} parent=67 // pred_check_branch
          %668 = sbr.rel (%p666) target = $region72
        $region71: #{tpu_custom_call.1} parent=67 // pred_region
          %s669 = sand.u32 %s165, 1
          %s670 = scalar_lea.sflag [#allocation4], %s669
          %s671 = sand.u32 %s165, 1
          %s672 = smul.addr %s671, 8
          %s673 = scalar_lea.vmem [#allocation10], %s672
          %674 = dma.done %s670, 128
        $region72: #{tpu_custom_call.1} parent=67 // pred_fallthru
          _
      $region68: #{tpu_custom_call.1} parent=5 // pred_fallthru
        _
    $region6: #{tpu_custom_call.1} parent=1 // loop_footer
      %s24 = sadd.s32 1, %s20
    $region7: #{tpu_custom_call.1} parent=1 // loop_footer_branch
      %19 = sbr.rel target = $region3
    $region8: #{tpu_custom_call.1} parent=1 // loop_exit
      _
    %675 = vsyncpa [#allocation3], 1
    %s676 = scalar_lea.sflag [#allocation3], 1
    %677 = vsyncpa %s676, 1
    %678 = vsyncpa [#allocation6], 1
    %679 = vsyncpa [#allocation9], 1
    %680 = vsyncpa [#allocation4], 1
    %s681 = scalar_lea.sflag [#allocation4], 1
    %682 = vsyncpa %s681, 1

// kernel: tpu_custom_call.1
$region0: #{tpu_custom_call.1}
  #allocation0 [shape = 'u32[]', space=smem, size = 0x4, offset = 0x4, fixed_abs, tag = 'smem constant byte address 0x4 - core index']
  #allocation1 [shape = 'u32[144,128]{1,0:T(1,128)}', space=vmem, size = 0x12000, scoped, tag = 'internal scratch']
  %s0 = inlined_call_operand.hbm [shape: bf16[16,128], index: 0, kind: input, shape index: {}]
  %s1 = inlined_call_operand.hbm [shape: bf16[128,128], index: 1, kind: input, shape index: {}]
  %s2 = inlined_call_operand.vmem [shape: f32[1,128], index: 2, kind: input, shape index: {}]
  %s3 = inlined_call_operand.hbm [shape: bf16[128,128], index: 3, kind: input, shape index: {}]
  %s4 = inlined_call_operand.vmem [shape: f32[1,128], index: 4, kind: input, shape index: {}]
  %s5 = inlined_call_operand.hbm [shape: bf16[128,128], index: 5, kind: input, shape index: {}]
  %s6 = inlined_call_operand.hbm [shape: f32[16,128], index: 6, kind: output, shape index: {}]
  %s7 = sld [smem:[#allocation0]]
  $region73: #{tpu_custom_call.1} parent=0
    _
  %s9 = ssub.s32 1, %s7
  %s10 = scalar_select 0, %s9, %s7
  $region1: #{tpu_custom_call.1} parent=0
    #allocation2 [shape = 'u8[4096]{0}', space=vmem, size = 0x1000, scoped, tag = 'input window, operand 0']
    #allocation3 [shape = 's32[2]{0}', space=sflag, size = 0x8, scoped, tag = 'scoped memory for tpu_custom_call.1']
    #allocation4 [shape = 's32[2]{0}', space=sflag, size = 0x8, scoped, tag = 'scoped memory for tpu_custom_call.1']
    #allocation5 [shape = 'u8[32768]{0}', space=vmem, size = 0x8000, scoped, tag = 'input window, operand 1, single buffered']
    #allocation6 [shape = 's32[1]{0}', space=sflag, size = 0x4, scoped, tag = 'scoped memory for tpu_custom_call.1']
    #allocation7 [shape = 'u8[32768]{0}', space=vmem, size = 0x8000, scoped, tag = 'input window, operand 3, single buffered']
    #allocation8 [shape = 'u8[32768]{0}', space=vmem, size = 0x8000, scoped, tag = 'input window, operand 5, single buffered']
    #allocation9 [shape = 's32[1]{0}', space=sflag, size = 0x4, scoped, tag = 'scoped memory for tpu_custom_call.1']
    #allocation10 [shape = 'u8[8192]{0}', space=vmem, size = 0x2000, scoped, tag = 'output window, operand 0']
    %11 = vsyncpa [#allocation3], 0
    %s12 = scalar_lea.sflag [#allocation3], 1
    %13 = vsyncpa %s12, 0
    %14 = vsyncpa [#allocation6], 0
    %15 = vsyncpa [#allocation9], 0
    %16 = vsyncpa [#allocation4], 0
    %s17 = scalar_lea.sflag [#allocation4], 1
    %18 = vsyncpa %s17, 0
    loop: start=0, step=1, limit=4
    $region2: #{tpu_custom_call.1} parent=1 // loop_pre_header
      _
    $region3: #{tpu_custom_call.1} parent=1 // loop_header
      %s20 = sphi 0, %s24
      %p21 = scmp.ge.s32.totalorder %s20, 4
      %s30 = sphi 0, %s32
      %s33 = sphi 0, %s30
      %s34 = sphi 0, %s33
      %s50 = sphi 0, %s34
      %s54 = sphi 0, %s54
      %s56 = sphi 0, %s54
      %s57 = sphi 0, %s56
      %s71 = sphi 0, %s57
      %s75 = sphi 0, %s75
      %s77 = sphi 0, %s75
      %s78 = sphi 0, %s77
      %s92 = sphi 0, %s78
      %s96 = sphi 0, %s96
      %s98 = sphi 0, %s96
      %s99 = sphi 0, %s98
      %s113 = sphi 0, %s99
      %s117 = sphi 0, %s117
      %s119 = sphi 0, %s117
      %s120 = sphi 0, %s119
      %s134 = sphi 0, %s120
      %s138 = sphi 0, %s138
      %s140 = sphi 0, %s138
      %s141 = sphi 0, %s140
      %s155 = sphi 0, %s141
      %s161 = sphi 0, %s163
      %s164 = sphi 0, %s161
      %s165 = sphi 0, %s164
      %s181 = sphi 0, %s165
    $region4: #{tpu_custom_call.1} parent=1 // loop_header_branch
      %23 = sbr.rel (%p21) target = $region8
    $region5: #{tpu_custom_call.1} parent=1 // loop_body
      %s25 = ssub.s32 %s20, 1
      %s26 = ssub.s32 %s20, 2
      %s27 = sadd.s32 %s20, 1
      %s28 = ssub.s32 %s20, %s27
      %p29 = scmp.eq.s32.totalorder %s28, 0
      %s31 = sadd.s32 %s30, 1
      %s32 = scalar_select %p29, %s30, %s31
      %p35 = pneg %p29
      %p36 = scmp.eq.s32.totalorder %s20, 1
      %p37 = por %p35, %p36
      %p38 = scmp.ne.s32.totalorder %s30, %s33
      %p39 = scmp.eq.s32.totalorder %s20, 0
      %p40 = por %p38, %p39
      %p41 = scmp.ne.s32.totalorder %s30, %s33
      %p42 = scmp.eq.s32.totalorder %s25, 1
      %p43 = por %p41, %p42
      %p44 = scmp.ne.s32.totalorder %s33, %s34
      %p45 = scmp.eq.s32.totalorder %s25, 0
      %p46 = por %p44, %p45
      %p47 = scmp.ne.s32.totalorder %s33, %s34
      %p48 = scmp.eq.s32.totalorder %s26, 1
      %p49 = por %p47, %p48
      %p51 = scmp.ne.s32.totalorder %s34, %s50
      %p52 = scmp.eq.s32.totalorder %s26, 0
      %p53 = por %p51, %p52
      %s55 = sadd.s32 %s54, 1
      %p58 = scmp.eq.s32.totalorder %s20, 1
      %p59 = scmp.ne.s32.totalorder %s54, %s56
      %p60 = scmp.eq.s32.totalorder %s20, 0
      %p61 = por %p59, %p60
      %p62 = scmp.ne.s32.totalorder %s54, %s56
      %p63 = scmp.eq.s32.totalorder %s25, 1
      %p64 = por %p62, %p63
      %p65 = scmp.ne.s32.totalorder %s56, %s57
      %p66 = scmp.eq.s32.totalorder %s25, 0
      %p67 = por %p65, %p66
      %p68 = scmp.ne.s32.totalorder %s56, %s57
      %p69 = scmp.eq.s32.totalorder %s26, 1
      %p70 = por %p68, %p69
      %p72 = scmp.ne.s32.totalorder %s57, %s71
      %p73 = scmp.eq.s32.totalorder %s26, 0
      %p74 = por %p72, %p73
      %s76 = sadd.s32 %s75, 1
      %p79 = scmp.eq.s32.totalorder %s20, 1
      %p80 = scmp.ne.s32.totalorder %s75, %s77
      %p81 = scmp.eq.s32.totalorder %s20, 0
      %p82 = por %p80, %p81
      %p83 = scmp.ne.s32.totalorder %s75, %s77
      %p84 = scmp.eq.s32.totalorder %s25, 1
      %p85 = por %p83, %p84
      %p86 = scmp.ne.s32.totalorder %s77, %s78
      %p87 = scmp.eq.s32.totalorder %s25, 0
      %p88 = por %p86, %p87
      %p89 = scmp.ne.s32.totalorder %s77, %s78
      %p90 = scmp.eq.s32.totalorder %s26, 1
      %p91 = por %p89, %p90
      %p93 = scmp.ne.s32.totalorder %s78, %s92
      %p94 = scmp.eq.s32.totalorder %s26, 0
      %p95 = por %p93, %p94
      %s97 = sadd.s32 %s96, 1
      %p100 = scmp.eq.s32.totalorder %s20, 1
      %p101 = scmp.ne.s32.totalorder %s96, %s98
      %p102 = scmp.eq.s32.totalorder %s20, 0
      %p103 = por %p101, %p102
      %p104 = scmp.ne.s32.totalorder %s96, %s98
      %p105 = scmp.eq.s32.totalorder %s25, 1
      %p106 = por %p104, %p105
      %p107 = scmp.ne.s32.totalorder %s98, %s99
      %p108 = scmp.eq.s32.totalorder %s25, 0
      %p109 = por %p107, %p108
      %p110 = scmp.ne.s32.totalorder %s98, %s99
      %p111 = scmp.eq.s32.totalorder %s26, 1
      %p112 = por %p110, %p111
      %p114 = scmp.ne.s32.totalorder %s99, %s113
      %p115 = scmp.eq.s32.totalorder %s26, 0
      %p116 = por %p114, %p115
      %s118 = sadd.s32 %s117, 1
      %p121 = scmp.eq.s32.totalorder %s20, 1
      %p122 = scmp.ne.s32.totalorder %s117, %s119
      %p123 = scmp.eq.s32.totalorder %s20, 0
      %p124 = por %p122, %p123
      %p125 = scmp.ne.s32.totalorder %s117, %s119
      %p126 = scmp.eq.s32.totalorder %s25, 1
      %p127 = por %p125, %p126
      %p128 = scmp.ne.s32.totalorder %s119, %s120
      %p129 = scmp.eq.s32.totalorder %s25, 0
      %p130 = por %p128, %p129
      %p131 = scmp.ne.s32.totalorder %s119, %s120
      %p132 = scmp.eq.s32.totalorder %s26, 1
      %p133 = por %p131, %p132
      %p135 = scmp.ne.s32.totalorder %s120, %s134
      %p136 = scmp.eq.s32.totalorder %s26, 0
      %p137 = por %p135, %p136
      %s139 = sadd.s32 %s138, 1
      %p142 = scmp.eq.s32.totalorder %s20, 1
      %p143 = scmp.ne.s32.totalorder %s138, %s140
      %p144 = scmp.eq.s32.totalorder %s20, 0
      %p145 = por %p143, %p144
      %p146 = scmp.ne.s32.totalorder %s138, %s140
      %p147 = scmp.eq.s32.totalorder %s25, 1
      %p148 = por %p146, %p147
      %p149 = scmp.ne.s32.totalorder %s140, %s141
      %p150 = scmp.eq.s32.totalorder %s25, 0
      %p151 = por %p149, %p150
      %p152 = scmp.ne.s32.totalorder %s140, %s141
      %p153 = scmp.eq.s32.totalorder %s26, 1
      %p154 = por %p152, %p153
      %p156 = scmp.ne.s32.totalorder %s141, %s155
      %p157 = scmp.eq.s32.totalorder %s26, 0
      %p158 = por %p156, %p157
      %s159 = ssub.s32 %s20, %s27
      %p160 = scmp.eq.s32.totalorder %s159, 0
      %s162 = sadd.s32 %s161, 1
      %s163 = scalar_select %p160, %s161, %s162
      %p166 = pneg %p160
      %p167 = scmp.eq.s32.totalorder %s20, 1
      %p168 = por %p166, %p167
      %p169 = scmp.ne.s32.totalorder %s161, %s164
      %p170 = scmp.eq.s32.totalorder %s20, 0
      %p171 = por %p169, %p170
      %p172 = scmp.ne.s32.totalorder %s161, %s164
      %p173 = scmp.eq.s32.totalorder %s25, 1
      %p174 = por %p172, %p173
      %p175 = scmp.ne.s32.totalorder %s164, %s165
      %p176 = scmp.eq.s32.totalorder %s25, 0
      %p177 = por %p175, %p176
      %p178 = scmp.ne.s32.totalorder %s164, %s165
      %p179 = scmp.eq.s32.totalorder %s26, 1
      %p180 = por %p178, %p179
      %p182 = scmp.ne.s32.totalorder %s165, %s181
      %p183 = scmp.eq.s32.totalorder %s26, 0
      %p184 = por %p182, %p183
      %p185 = scmp.le.s32.totalorder 1, %s20
      %p186 = scmp.lt.s32.totalorder %s20, 3
      %p187 = pnand %p185, %p186
      %p188 = pneg %p187
      // Predicated region
      $region9: #{tpu_custom_call.1} parent=5 // pred_check
        _
      $region10: #{tpu_custom_call.1} parent=5 // pred_check_branch
        %190 = sbr.rel (%p187) target = $region12
      $region11: #{tpu_custom_call.1} parent=5 // pred_region
        %s191 = ssub.s32 %s20, 1
        // Predicated region
        $region13: #{tpu_custom_call.1} parent=11 // pred_check
          %p192 = pneg %p67
        $region14: #{tpu_custom_call.1} parent=11 // pred_check_branch
          %194 = sbr.rel (%p192) target = $region16
        $region15: #{tpu_custom_call.1} parent=11 // pred_region
          %s196 = ssub.s32 1024, 1024
          %197 = vsyncadd [#allocation6], %s196
          %s198 = sshll.u32 [#allocation5], 4
          %s199 = int_to_ptr.vmem [resolvable:$true] %s198
          %204 = dma.hbm_to_vmem [thread:$0]  %s1, 1024, %s199, [#allocation6], 64, 64, 4
        $region16: #{tpu_custom_call.1} parent=11 // pred_fallthru
          _
        // Predicated region
        $region17: #{tpu_custom_call.1} parent=11 // pred_check
          %p205 = pneg %p88
        $region18: #{tpu_custom_call.1} parent=11 // pred_check_branch
          %207 = sbr.rel (%p205) target = $region20
        $region19: #{tpu_custom_call.1} parent=11 // pred_region
          _
        $region20: #{tpu_custom_call.1} parent=11 // pred_fallthru
          _
        // Predicated region
        $region21: #{tpu_custom_call.1} parent=11 // pred_check
          %p208 = pneg %p109
        $region22: #{tpu_custom_call.1} parent=11 // pred_check_branch
          %210 = sbr.rel (%p208) target = $region24
        $region23: #{tpu_custom_call.1} parent=11 // pred_region
          %s212 = ssub.s32 1024, 1024
          %213 = vsyncadd [#allocation6], %s212
          %s214 = sshll.u32 [#allocation7], 4
          %s215 = int_to_ptr.vmem [resolvable:$true] %s214
          %220 = dma.hbm_to_vmem [thread:$0]  %s3, 1024, %s215, [#allocation6], 64, 64, 4
        $region24: #{tpu_custom_call.1} parent=11 // pred_fallthru
          _
        // Predicated region
        $region25: #{tpu_custom_call.1} parent=11 // pred_check
          %p221 = pneg %p130
        $region26: #{tpu_custom_call.1} parent=11 // pred_check_branch
          %223 = sbr.rel (%p221) target = $region28
        $region27: #{tpu_custom_call.1} parent=11 // pred_region
          _
        $region28: #{tpu_custom_call.1} parent=11 // pred_fallthru
          _
        // Predicated region
        $region29: #{tpu_custom_call.1} parent=11 // pred_check
          %p224 = pneg %p151
        $region30: #{tpu_custom_call.1} parent=11 // pred_check_branch
          %226 = sbr.rel (%p224) target = $region32
        $region31: #{tpu_custom_call.1} parent=11 // pred_region
          %s228 = ssub.s32 1024, 1024
          %229 = vsyncadd [#allocation9], %s228
          %s230 = sshll.u32 [#allocation8], 4
          %s231 = int_to_ptr.vmem [resolvable:$true] %s230
          %236 = dma.hbm_to_vmem [thread:$0]  %s5, 1024, %s231, [#allocation9], 64, 64, 4
        $region32: #{tpu_custom_call.1} parent=11 // pred_fallthru
          _
      $region12: #{tpu_custom_call.1} parent=5 // pred_fallthru
        _
      %p237 = scmp.lt.s32.totalorder %s20, 2
      // Predicated region
      $region33: #{tpu_custom_call.1} parent=5 // pred_check
        %p238 = pneg %p237
      $region34: #{tpu_custom_call.1} parent=5 // pred_check_branch
        %240 = sbr.rel (%p238) target = $region36
      $region35: #{tpu_custom_call.1} parent=5 // pred_region
        // Predicated region
        $region37: #{tpu_custom_call.1} parent=35 // pred_check
          %p241 = pneg %p40
        $region38: #{tpu_custom_call.1} parent=35 // pred_check_branch
          %243 = sbr.rel (%p241) target = $region40
        $region39: #{tpu_custom_call.1} parent=35 // pred_region
          %s244 = sand.u32 %s30, 1
          %s245 = scalar_lea.sflag [#allocation3], %s244
          %s246 = sand.u32 %s30, 1
          %s247 = smul.addr %s246, 4
          %s248 = scalar_lea.vmem [#allocation2], %s247
          %s250 = ssub.s32 64, 64
          %251 = vsyncadd %s245, %s250
          %s252 = smul.addr %s20, 64
          %s253 = scalar_lea.hbm %s0, %s252
          %s255 = sshll.u32 %s248, 4
          %s256 = int_to_ptr.vmem [resolvable:$true] %s255
          %258 = dma.hbm_to_vmem [thread:$0]  %s253, 64, %s256, %s245
        $region40: #{tpu_custom_call.1} parent=35 // pred_fallthru
          _
      $region36: #{tpu_custom_call.1} parent=5 // pred_fallthru
        _
      %p259 = scmp.le.s32.totalorder 1, %s20
      %p260 = scmp.lt.s32.totalorder %s20, 3
      %p261 = pnand %p259, %p260
      %p262 = pneg %p261
      // Predicated region
      $region41: #{tpu_custom_call.1} parent=5 // pred_check
        _
      $region42: #{tpu_custom_call.1} parent=5 // pred_check_branch
        %264 = sbr.rel (%p261) target = $region44
      $region43: #{tpu_custom_call.1} parent=5 // pred_region
        %s265 = ssub.s32 %s20, 1
        %s266 = sand.u32 %s33, 1
        %s267 = scalar_lea.sflag [#allocation3], %s266
        %s268 = sand.u32 %s33, 1
        %s269 = smul.addr %s268, 4
        %s270 = scalar_lea.vmem [#allocation2], %s269
        // Predicated region
        $region45: #{tpu_custom_call.1} parent=43 // pred_check
          %p271 = pneg %p46
        $region46: #{tpu_custom_call.1} parent=43 // pred_check_branch
          %273 = sbr.rel (%p271) target = $region48
        $region47: #{tpu_custom_call.1} parent=43 // pred_region
          %274 = dma.done %s267, 64
        $region48: #{tpu_custom_call.1} parent=43 // pred_fallthru
          _
        // Predicated region
        $region49: #{tpu_custom_call.1} parent=43 // pred_check
          %p275 = pneg %p67
        $region50: #{tpu_custom_call.1} parent=43 // pred_check_branch
          %277 = sbr.rel (%p275) target = $region52
        $region51: #{tpu_custom_call.1} parent=43 // pred_region
          %278 = dma.done [#allocation6], 1024
        $region52: #{tpu_custom_call.1} parent=43 // pred_fallthru
          _
        // Predicated region
        $region53: #{tpu_custom_call.1} parent=43 // pred_check
          %p279 = pneg %p109
        $region54: #{tpu_custom_call.1} parent=43 // pred_check_branch
          %281 = sbr.rel (%p279) target = $region56
        $region55: #{tpu_custom_call.1} parent=43 // pred_region
          %282 = dma.done [#allocation6], 1024
        $region56: #{tpu_custom_call.1} parent=43 // pred_fallthru
          _
        // Predicated region
        $region57: #{tpu_custom_call.1} parent=43 // pred_check
          %p283 = pneg %p151
        $region58: #{tpu_custom_call.1} parent=43 // pred_check_branch
          %285 = sbr.rel (%p283) target = $region60
        $region59: #{tpu_custom_call.1} parent=43 // pred_region
          %286 = dma.done [#allocation9], 1024
        $region60: #{tpu_custom_call.1} parent=43 // pred_fallthru
          _
        %s287 = sand.u32 %s33, 1
        %s288 = scalar_lea.sflag [#allocation3], %s287
        %s289 = sand.u32 %s33, 1
        %s290 = smul.addr %s289, 4
        %s291 = scalar_lea.vmem [#allocation2], %s290
        %p292 = pneg %p46
        %p293 = pneg %p43
        %p294 = pneg %p67
        %p295 = pneg %p64
        %p296 = pneg %p88
        %p297 = pneg %p85
        %p298 = pneg %p109
        %p299 = pneg %p106
        %p300 = pneg %p130
        %p301 = pneg %p127
        %p302 = pneg %p151
        %p303 = pneg %p148
        %p304 = pneg %p177
        %p305 = pneg %p174
        %s306 = sand.u32 %s164, 1
        %s307 = scalar_lea.sflag [#allocation4], %s306
        %s308 = sand.u32 %s164, 1
        %s309 = smul.addr %s308, 8
        %s310 = scalar_lea.vmem [#allocation10], %s309
        %v312 = vld [vmem:[%s270] sm:$0xf]
        %v313 = vmax.bf16 %v312, 0
        %v314 = vld [vmem:[#allocation5] sm:$0xf]
        %v315 = vld [vmem:[#allocation5 + $0x4] sm:$0xf]
        %v316 = vld [vmem:[#allocation5 + $0x8] sm:$0xf]
        %v317 = vld [vmem:[#allocation5 + $0xc] sm:$0xf]
        %v318 = vld [vmem:[#allocation5 + $0x10] sm:$0xf]
        %v319 = vld [vmem:[#allocation5 + $0x14] sm:$0xf]
        %v320 = vld [vmem:[#allocation5 + $0x18] sm:$0xf]
        %v321 = vld [vmem:[#allocation5 + $0x1c] sm:$0xf]
        %v322 = vld [vmem:[#allocation5 + $0x20] sm:$0xf]
        %v323 = vld [vmem:[#allocation5 + $0x24] sm:$0xf]
        %v324 = vld [vmem:[#allocation5 + $0x28] sm:$0xf]
        %v325 = vld [vmem:[#allocation5 + $0x2c] sm:$0xf]
        %v326 = vld [vmem:[#allocation5 + $0x30] sm:$0xf]
        %v327 = vld [vmem:[#allocation5 + $0x34] sm:$0xf]
        %v328 = vld [vmem:[#allocation5 + $0x38] sm:$0xf]
        %v329 = vld [vmem:[#allocation5 + $0x3c] sm:$0xf]
        %v330 = vld [vmem:[%s2] sm:$0x1]
        %v332 = vlaneseq
        %v333 = vshrl.u32 %v332, 7
        %v334 = vsub.s32 0, %v333
        %v335 = vrot.slane %v330, %v334
        %v353 = vunpack.c.l.b16 %v314
        %v354 = vunpack.c.l.b16 %v315
        %v355 = vunpack.c.l.b16 %v316
        %v356 = vunpack.c.l.b16 %v317
        %v357 = vunpack.c.l.b16 %v318
        %v358 = vunpack.c.l.b16 %v319
        %v359 = vunpack.c.l.b16 %v320
        %v360 = vunpack.c.l.b16 %v321
        %v361 = vunpack.c.l.b16 %v322
        %v362 = vunpack.c.l.b16 %v323
        %v363 = vunpack.c.l.b16 %v324
        %v364 = vunpack.c.l.b16 %v325
        %v365 = vunpack.c.l.b16 %v326
        %v366 = vunpack.c.l.b16 %v327
        %v367 = vunpack.c.l.b16 %v328
        %v368 = vunpack.c.l.b16 %v329
        %v369 = vpack.c.b16 %v354, %v353
        %v370 = vpack.c.b16 %v356, %v355
        %v371 = vpack.c.b16 %v358, %v357
        %v372 = vpack.c.b16 %v360, %v359
        %v373 = vpack.c.b16 %v362, %v361
        %v374 = vpack.c.b16 %v364, %v363
        %v375 = vpack.c.b16 %v366, %v365
        %v376 = vpack.c.b16 %v368, %v367
        %385 = vmatprep.subr.bf16.mxu0 0
        %386 = vmatpush1.bf16.msra.mxu0 %v369
        %387 = vmatprep.subr.bf16.mxu0 0
        %388 = vmatpush1.bf16.msra.mxu0 %v370
        %389 = vmatprep.subr.bf16.mxu0 0
        %390 = vmatpush1.bf16.msra.mxu0 %v371
        %391 = vmatprep.subr.bf16.mxu0 0
        %392 = vmatpush1.bf16.msra.mxu0 %v372
        %393 = vmatprep.subr.bf16.mxu0 0
        %394 = vmatpush1.bf16.msra.mxu0 %v373
        %395 = vmatprep.subr.bf16.mxu0 0
        %396 = vmatpush1.bf16.msra.mxu0 %v374
        %397 = vmatprep.subr.bf16.mxu0 0
        %398 = vmatpush1.bf16.msra.mxu0 %v375
        %399 = vmatprep.subr.bf16.mxu0 0
        %400 = vmatpush1.bf16.msra.mxu0 %v376
        %401 = vmatprep.subr.bf16.mxu0 0
        %402 = vmatpush1.bf16.msra.mxu0 0
        %403 = vmatprep.subr.bf16.mxu0 0
        %404 = vmatpush1.bf16.msra.mxu0 0
        %405 = vmatprep.subr.bf16.mxu0 0
        %406 = vmatpush1.bf16.msra.mxu0 0
        %407 = vmatprep.subr.bf16.mxu0 0
        %408 = vmatpush1.bf16.msra.mxu0 0
        %409 = vmatprep.subr.bf16.mxu0 0
        %410 = vmatpush1.bf16.msra.mxu0 0
        %411 = vmatprep.subr.bf16.mxu0 0
        %412 = vmatpush1.bf16.msra.mxu0 0
        %413 = vmatprep.subr.bf16.mxu0 0
        %414 = vmatpush1.bf16.msra.mxu0 0
        %415 = vmatprep.subr.bf16.mxu0 0
        %416 = vmatpush1.bf16.msra.mxu0 0
        %417 = vmatprep.mubr.bf16.mxu0 0
        %418 = vmatmul.mubr.bf16.gmra.mrb[0].mxu0 %v313
        %v419 = vpop.f32.mrb[0].mxu0
        %v420 = vadd.f32 %v335, %v419
        %v421 = vpop.f32.mrb[0].mxu0
        %v422 = vpop.f32.mrb[0].mxu0
        %v423 = vpop.f32.mrb[0].mxu0
        %424 = vdwg.mxu0
        %v425 = vmax.f32 %v420, 0.0
        %v426 = vpack.c.bf16 %v425, %v425
        %v427 = vld [vmem:[#allocation7] sm:$0xf]
        %v428 = vld [vmem:[#allocation7 + $0x4] sm:$0xf]
        %v429 = vld [vmem:[#allocation7 + $0x8] sm:$0xf]
        %v430 = vld [vmem:[#allocation7 + $0xc] sm:$0xf]
        %v431 = vld [vmem:[#allocation7 + $0x10] sm:$0xf]
        %v432 = vld [vmem:[#allocation7 + $0x14] sm:$0xf]
        %v433 = vld [vmem:[#allocation7 + $0x18] sm:$0xf]
        %v434 = vld [vmem:[#allocation7 + $0x1c] sm:$0xf]
        %v435 = vld [vmem:[#allocation7 + $0x20] sm:$0xf]
        %v436 = vld [vmem:[#allocation7 + $0x24] sm:$0xf]
        %v437 = vld [vmem:[#allocation7 + $0x28] sm:$0xf]
        %v438 = vld [vmem:[#allocation7 + $0x2c] sm:$0xf]
        %v439 = vld [vmem:[#allocation7 + $0x30] sm:$0xf]
        %v440 = vld [vmem:[#allocation7 + $0x34] sm:$0xf]
        %v441 = vld [vmem:[#allocation7 + $0x38] sm:$0xf]
        %v442 = vld [vmem:[#allocation7 + $0x3c] sm:$0xf]
        %v443 = vld [vmem:[%s4] sm:$0x1]
        %v445 = vlaneseq
        %v446 = vshrl.u32 %v445, 7
        %v447 = vsub.s32 0, %v446
        %v448 = vrot.slane %v443, %v447
        %v466 = vunpack.c.l.b16 %v427
        %v467 = vunpack.c.l.b16 %v428
        %v468 = vunpack.c.l.b16 %v429
        %v469 = vunpack.c.l.b16 %v430
        %v470 = vunpack.c.l.b16 %v431
        %v471 = vunpack.c.l.b16 %v432
        %v472 = vunpack.c.l.b16 %v433
        %v473 = vunpack.c.l.b16 %v434
        %v474 = vunpack.c.l.b16 %v435
        %v475 = vunpack.c.l.b16 %v436
        %v476 = vunpack.c.l.b16 %v437
        %v477 = vunpack.c.l.b16 %v438
        %v478 = vunpack.c.l.b16 %v439
        %v479 = vunpack.c.l.b16 %v440
        %v480 = vunpack.c.l.b16 %v441
        %v481 = vunpack.c.l.b16 %v442
        %v482 = vpack.c.b16 %v467, %v466
        %v483 = vpack.c.b16 %v469, %v468
        %v484 = vpack.c.b16 %v471, %v470
        %v485 = vpack.c.b16 %v473, %v472
        %v486 = vpack.c.b16 %v475, %v474
        %v487 = vpack.c.b16 %v477, %v476
        %v488 = vpack.c.b16 %v479, %v478
        %v489 = vpack.c.b16 %v481, %v480
        %498 = vmatprep.subr.bf16.mxu0 0
        %499 = vmatpush1.bf16.msra.mxu0 %v482
        %500 = vmatprep.subr.bf16.mxu0 0
        %501 = vmatpush1.bf16.msra.mxu0 %v483
        %502 = vmatprep.subr.bf16.mxu0 0
        %503 = vmatpush1.bf16.msra.mxu0 %v484
        %504 = vmatprep.subr.bf16.mxu0 0
        %505 = vmatpush1.bf16.msra.mxu0 %v485
        %506 = vmatprep.subr.bf16.mxu0 0
        %507 = vmatpush1.bf16.msra.mxu0 %v486
        %508 = vmatprep.subr.bf16.mxu0 0
        %509 = vmatpush1.bf16.msra.mxu0 %v487
        %510 = vmatprep.subr.bf16.mxu0 0
        %511 = vmatpush1.bf16.msra.mxu0 %v488
        %512 = vmatprep.subr.bf16.mxu0 0
        %513 = vmatpush1.bf16.msra.mxu0 %v489
        %514 = vmatprep.subr.bf16.mxu0 0
        %515 = vmatpush1.bf16.msra.mxu0 0
        %516 = vmatprep.subr.bf16.mxu0 0
        %517 = vmatpush1.bf16.msra.mxu0 0
        %518 = vmatprep.subr.bf16.mxu0 0
        %519 = vmatpush1.bf16.msra.mxu0 0
        %520 = vmatprep.subr.bf16.mxu0 0
        %521 = vmatpush1.bf16.msra.mxu0 0
        %522 = vmatprep.subr.bf16.mxu0 0
        %523 = vmatpush1.bf16.msra.mxu0 0
        %524 = vmatprep.subr.bf16.mxu0 0
        %525 = vmatpush1.bf16.msra.mxu0 0
        %526 = vmatprep.subr.bf16.mxu0 0
        %527 = vmatpush1.bf16.msra.mxu0 0
        %528 = vmatprep.subr.bf16.mxu0 0
        %529 = vmatpush1.bf16.msra.mxu0 0
        %530 = vmatprep.mubr.bf16.mxu0 0
        %531 = vmatmul.mubr.bf16.gmra.mrb[0].mxu0 %v426
        %v532 = vpop.f32.mrb[0].mxu0
        %v533 = vadd.f32 %v448, %v532
        %v534 = vpop.f32.mrb[0].mxu0
        %v535 = vpop.f32.mrb[0].mxu0
        %v536 = vpop.f32.mrb[0].mxu0
        %537 = vdwg.mxu0
        %v538 = vld [vmem:[#allocation8] sm:$0xf]
        %v539 = vld [vmem:[#allocation8 + $0x4] sm:$0xf]
        %v540 = vld [vmem:[#allocation8 + $0x8] sm:$0xf]
        %v541 = vld [vmem:[#allocation8 + $0xc] sm:$0xf]
        %v542 = vld [vmem:[#allocation8 + $0x10] sm:$0xf]
        %v543 = vld [vmem:[#allocation8 + $0x14] sm:$0xf]
        %v544 = vld [vmem:[#allocation8 + $0x18] sm:$0xf]
        %v545 = vld [vmem:[#allocation8 + $0x1c] sm:$0xf]
        %v546 = vld [vmem:[#allocation8 + $0x20] sm:$0xf]
        %v547 = vld [vmem:[#allocation8 + $0x24] sm:$0xf]
        %v548 = vld [vmem:[#allocation8 + $0x28] sm:$0xf]
        %v549 = vld [vmem:[#allocation8 + $0x2c] sm:$0xf]
        %v550 = vld [vmem:[#allocation8 + $0x30] sm:$0xf]
        %v551 = vld [vmem:[#allocation8 + $0x34] sm:$0xf]
        %v552 = vld [vmem:[#allocation8 + $0x38] sm:$0xf]
        %v553 = vld [vmem:[#allocation8 + $0x3c] sm:$0xf]
        %v570 = vunpack.c.l.b16 %v538
        %v571 = vunpack.c.l.b16 %v539
        %v572 = vunpack.c.l.b16 %v540
        %v573 = vunpack.c.l.b16 %v541
        %v574 = vunpack.c.l.b16 %v542
        %v575 = vunpack.c.l.b16 %v543
        %v576 = vunpack.c.l.b16 %v544
        %v577 = vunpack.c.l.b16 %v545
        %v578 = vunpack.c.l.b16 %v546
        %v579 = vunpack.c.l.b16 %v547
        %v580 = vunpack.c.l.b16 %v548
        %v581 = vunpack.c.l.b16 %v549
        %v582 = vunpack.c.l.b16 %v550
        %v583 = vunpack.c.l.b16 %v551
        %v584 = vunpack.c.l.b16 %v552
        %v585 = vunpack.c.l.b16 %v553
        %v586 = vpack.c.b16 %v571, %v570
        %v587 = vpack.c.b16 %v573, %v572
        %v588 = vpack.c.b16 %v575, %v574
        %v589 = vpack.c.b16 %v577, %v576
        %v590 = vpack.c.b16 %v579, %v578
        %v591 = vpack.c.b16 %v581, %v580
        %v592 = vpack.c.b16 %v583, %v582
        %v593 = vpack.c.b16 %v585, %v584
        %602 = vmatprep.subr.bf16.mxu0 0
        %603 = vmatpush1.bf16.msra.mxu0 %v586
        %604 = vmatprep.subr.bf16.mxu0 0
        %605 = vmatpush1.bf16.msra.mxu0 %v587
        %606 = vmatprep.subr.bf16.mxu0 0
        %607 = vmatpush1.bf16.msra.mxu0 %v588
        %608 = vmatprep.subr.bf16.mxu0 0
        %609 = vmatpush1.bf16.msra.mxu0 %v589
        %610 = vmatprep.subr.bf16.mxu0 0
        %611 = vmatpush1.bf16.msra.mxu0 %v590
        %612 = vmatprep.subr.bf16.mxu0 0
        %613 = vmatpush1.bf16.msra.mxu0 %v591
        %614 = vmatprep.subr.bf16.mxu0 0
        %615 = vmatpush1.bf16.msra.mxu0 %v592
        %616 = vmatprep.subr.bf16.mxu0 0
        %617 = vmatpush1.bf16.msra.mxu0 %v593
        %618 = vmatprep.subr.bf16.mxu0 0
        %619 = vmatpush1.bf16.msra.mxu0 0
        %620 = vmatprep.subr.bf16.mxu0 0
        %621 = vmatpush1.bf16.msra.mxu0 0
        %622 = vmatprep.subr.bf16.mxu0 0
        %623 = vmatpush1.bf16.msra.mxu0 0
        %624 = vmatprep.subr.bf16.mxu0 0
        %625 = vmatpush1.bf16.msra.mxu0 0
        %626 = vmatprep.subr.bf16.mxu0 0
        %627 = vmatpush1.bf16.msra.mxu0 0
        %628 = vmatprep.subr.bf16.mxu0 0
        %629 = vmatpush1.bf16.msra.mxu0 0
        %630 = vmatprep.subr.bf16.mxu0 0
        %631 = vmatpush1.bf16.msra.mxu0 0
        %632 = vmatprep.subr.bf16.mxu0 0
        %633 = vmatpush1.bf16.msra.mxu0 0
        %634 = vmatprep.mubr.bf16.mxu0 0
        %635 = vmatmul.mubr.bf16.gmra.mrb[0].mxu0 %v312
        %v636 = vpop.f32.mrb[0].mxu0
        %v637 = vadd.f32 %v533, %v636
        %v638 = vpop.f32.mrb[0].mxu0
        %v639 = vpop.f32.mrb[0].mxu0
        %v640 = vpop.f32.mrb[0].mxu0
        %641 = vdwg.mxu0
        %642 = vst [vmem:[%s310] sm:$0xff] %v637
        %s643 = sand.u32 %s164, 1
        %s644 = scalar_lea.sflag [#allocation4], %s643
        %s645 = sand.u32 %s164, 1
        %s646 = smul.addr %s645, 8
        %s647 = scalar_lea.vmem [#allocation10], %s646
        // Predicated region
        $region61: #{tpu_custom_call.1} parent=43 // pred_check
          %p648 = pneg %p174
        $region62: #{tpu_custom_call.1} parent=43 // pred_check_branch
          %650 = sbr.rel (%p648) target = $region64
        $region63: #{tpu_custom_call.1} parent=43 // pred_region
          %s652 = ssub.s32 128, 128
          %653 = vsyncadd %s644, %s652
          %s654 = smul.addr %s25, 128
          %s655 = scalar_lea.hbm %s6, %s654
          %s657 = sshll.u32 %s647, 4
          %s658 = int_to_ptr.vmem [resolvable:$true] %s657
          %660 = dma.vmem_to_hbm [thread:$0]  %s658, 128, %s655, %s644
        $region64: #{tpu_custom_call.1} parent=43 // pred_fallthru
          _
      $region44: #{tpu_custom_call.1} parent=5 // pred_fallthru
        _
      %p661 = scmp.le.s32.totalorder 2, %s20
      // Predicated region
      $region65: #{tpu_custom_call.1} parent=5 // pred_check
        %p662 = pneg %p661
      $region66: #{tpu_custom_call.1} parent=5 // pred_check_branch
        %664 = sbr.rel (%p662) target = $region68
      $region67: #{tpu_custom_call.1} parent=5 // pred_region
        %s665 = ssub.s32 %s20, 2
        // Predicated region
        $region69: #{tpu_custom_call.1} parent=67 // pred_check
          %p666 = pneg %p180
        $region70: #{tpu_custom_call.1} parent=67 // pred_check_branch
          %668 = sbr.rel (%p666) target = $region72
        $region71: #{tpu_custom_call.1} parent=67 // pred_region
          %s669 = sand.u32 %s165, 1
          %s670 = scalar_lea.sflag [#allocation4], %s669
          %s671 = sand.u32 %s165, 1
          %s672 = smul.addr %s671, 8
          %s673 = scalar_lea.vmem [#allocation10], %s672
          %674 = dma.done %s670, 128
        $region72: #{tpu_custom_call.1} parent=67 // pred_fallthru
          _
      $region68: #{tpu_custom_call.1} parent=5 // pred_fallthru
        _
    $region6: #{tpu_custom_call.1} parent=1 // loop_footer
      %s24 = sadd.s32 1, %s20
    $region7: #{tpu_custom_call.1} parent=1 // loop_footer_branch
      %19 = sbr.rel target = $region3
    $region8: #{tpu_custom_call.1} parent=1 // loop_exit
      _
    %675 = vsyncpa [#allocation3], 1
    %s676 = scalar_lea.sflag [#allocation3], 1
    %677 = vsyncpa %s676, 1
    %678 = vsyncpa [#allocation6], 1
    %679 = vsyncpa [#allocation9], 1
    %680 = vsyncpa [#allocation4], 1
    %s681 = scalar_lea.sflag [#allocation4], 1
    %682 = vsyncpa %s681, 1

</llo_original>
